<compile_context>
chip_gen: v6e
topology: v6e:2x2x1
jax: 0.10.0
libtpu: 0.0.40
codegen_flags: <defaults>
</compile_context>

<pallas_src>
import jax
import jax.numpy as jnp
from jax import lax
from jax.experimental import pallas as pl
from jax.experimental.pallas import tpu as pltpu

KSIZE = 3
SCALE = 2
_HALO_BLK = 8  # granularity (rows) of the H-halo blocks; sublane multiple


def _upsample_conv_prelu_kernel(x_ref, top_ref, bot_ref, w_ref, b_ref, a_ref,
                                o_ref):
    # x_ref  : (1, TH, W, Cin)   f32  current tile rows (unpadded)
    # top_ref: (1, 8,  W, Cin)   f32  8-row block just above the tile (clamped)
    # bot_ref: (1, 8,  W, Cin)   f32  8-row block just below the tile (clamped)
    # w_ref  : (9*Cin, Cout)     bf16/f32 im2col weight matrix
    # b_ref  : (1, Cout)         f32
    # a_ref  : (1,)              f32 SMEM scalar (shared PReLU slope)
    # o_ref  : (1, TH, W, Cout)  bf16/f32 conv+bias+PReLU output, pre-pixel-shuffle
    t = pl.program_id(1)
    n_t = pl.num_programs(1)
    TH, W, Cin = x_ref.shape[1], x_ref.shape[2], x_ref.shape[3]
    Cout = o_ref.shape[3]
    cdtype = w_ref.dtype

    cur = x_ref[0]                                              # (TH, W, Cin) f32

    # ---- H halo: real neighbour rows in the interior, replicated at edges ----
    top_src = top_ref[0, _HALO_BLK - 1:_HALO_BLK]               # (1, W, Cin)
    bot_src = bot_ref[0, 0:1]                                   # (1, W, Cin)
    top_row = jnp.where(t == 0, cur[0:1], top_src)
    bot_row = jnp.where(t == n_t - 1, cur[TH - 1:TH], bot_src)
    xr = jnp.concatenate([top_row, cur, bot_row], axis=0)       # (TH+2, W, Cin)

    # ---- W halo: XLU rolls + edge select (no sublane-unaligned slices) -------
    if W % _HALO_BLK == 0:
        col = lax.broadcasted_iota(jnp.int32, xr.shape, 1)
        x_lft = jnp.where(col == 0, xr, pltpu.roll(xr, shift=1, axis=1))
        x_rgt = jnp.where(col == W - 1, xr, pltpu.roll(xr, shift=W - 1, axis=1))
    else:
        # Fallback (slower, relayout-prone but always lowers) for odd W.
        x_lft = jnp.concatenate([xr[:, 0:1, :], xr[:, :W - 1, :]], axis=1)
        x_rgt = jnp.concatenate([xr[:, 1:, :], xr[:, W - 1:W, :]], axis=1)

    # Cast ONCE to the MXU compute dtype before the 9-way im2col concat.
    shifted = (x_lft.astype(cdtype), xr.astype(cdtype), x_rgt.astype(cdtype))

    # ---- im2col: one big MXU matmul (TH*W, 9*Cin) x (9*Cin, Cout) ------------
    cols = []
    for dy in range(KSIZE):
        for dx in range(KSIZE):
            cols.append(shifted[dx][dy:dy + TH])   # cheap leading-dim slices
    patch = jnp.concatenate(cols, axis=-1).reshape(TH * W, KSIZE * KSIZE * Cin)

    prec = lax.Precision.HIGHEST if cdtype == jnp.float32 else None
    acc = jnp.dot(patch, w_ref[...], preferred_element_type=jnp.float32,
                  precision=prec)                               # (TH*W, Cout) f32

    # ---- epilogue: bias + PReLU in f32 (safe on v5e VPU) ---------------------
    acc = acc + b_ref[...]
    acc = jnp.where(acc >= 0, acc, a_ref[0] * acc)
    o_ref[...] = acc.reshape(1, TH, W, Cout).astype(o_ref.dtype)


def _pad_to(x, m):
    return ((x + m - 1) // m) * m


def _tile_vmem_bytes(TH, W, Cin, Cout, citem, oitem):
    """Pessimistic VMEM bytes for one grid step (double-buffered blocks + temps)."""
    Wp = _pad_to(W, 8)
    cin_l = _pad_to(Cin, 128)            # lane padding of the NHWC blocks
    cout_l = _pad_to(Cout, 128)
    k2cin_l = _pad_to(KSIZE * KSIZE * Cin, 128)
    b = 0
    b += 2 * TH * Wp * cin_l * 4                          # input tile (x2 buffers)
    b += 2 * 2 * _HALO_BLK * Wp * cin_l * 4               # top + bottom halo blocks
    b += 2 * TH * Wp * cout_l * oitem                     # output block
    b += 2 * _pad_to(KSIZE * KSIZE * Cin, 8) * cout_l * citem   # im2col weights
    b += 2 * 8 * cout_l * 4                               # bias
    # in-kernel live intermediates
    b += 3 * (TH + 2) * Wp * cin_l * 4                    # xr + two rolled copies (f32)
    b += 3 * (TH + 2) * Wp * cin_l * citem                # their compute-dtype casts
    b += 2 * TH * Wp * k2cin_l * citem                    # im2col cols + patch
    b += 2 * _pad_to(TH * W, 8) * cout_l * 4              # f32 accumulator + epilogue
    return b


def _vmem_capacity_bytes(default=64 * 1024 * 1024):
    """Physical VMEM of the attached TPU; conservative 64 MiB (v7x) fallback."""
    try:
        info = pltpu.get_tpu_info()
    except Exception:
        return default
    for name in ("vmem_capacity_bytes", "vmem_size_bytes", "vmem_bytes"):
        v = getattr(info, name, None)
        if isinstance(v, int) and v > 0:
            return v
    return default


def _pick_tile_h(N, H, W, Cin, Cout, citem, oitem, budget, min_grid_steps):
    """Largest multiple-of-8 divisor of H that fits the VMEM budget, preferring
    enough grid steps to keep both TensorCores busy on v7x."""
    cands = [th for th in range(_HALO_BLK, H + 1, _HALO_BLK) if H % th == 0]
    if not cands:
        cands = [H]
    fits = [th for th in cands
            if _tile_vmem_bytes(th, W, Cin, Cout, citem, oitem) <= budget]
    if not fits:
        fits = [min(cands)]
    pref = [th for th in fits if N * (H // th) >= min_grid_steps]
    return max(pref) if pref else max(fits)


def upsample_block(x_nchw, weight_oihw, bias, prelu_a, scale=SCALE,
                   compute_dtype=jnp.bfloat16, vmem_budget_bytes=None,
                   min_grid_steps=4):
    """Full UpsampleBLock forward.  x_nchw: (N, C, H, W) -> (N, C, 2H, 2W)."""
    N, C, H, W = x_nchw.shape
    Cout = C * scale * scale
    assert scale == SCALE, "kernel written for scale_factor=2"
    assert weight_oihw.shape == (Cout, C, KSIZE, KSIZE)
    assert H % _HALO_BLK == 0, "H must be a multiple of 8 for halo tiling"

    compute_dtype = jnp.dtype(compute_dtype)
    inter_dtype = (jnp.dtype(jnp.float32) if compute_dtype == jnp.float32
                   else jnp.dtype(jnp.bfloat16))
    citem, oitem = compute_dtype.itemsize, inter_dtype.itemsize

    # --- glue: NCHW -> NHWC (kept only to match the PyTorch API)
    x_nhwc = jnp.transpose(x_nchw, (0, 2, 3, 1))                 # (N, H, W, C)

    # --- parameters: OIHW -> (ky,kx,Cin,Cout) -> single im2col matrix (9*Cin, Cout)
    w_hwio = jnp.transpose(weight_oihw, (2, 3, 1, 0))            # (3,3,Cin,Cout)
    w_flat = w_hwio.reshape(KSIZE * KSIZE * C, Cout).astype(compute_dtype)
    b2 = bias.reshape(1, Cout).astype(jnp.float32)
    a1 = jnp.asarray(prelu_a, jnp.float32).reshape(1)

    # --- generation-aware VMEM budgeting + explicit scoped-VMEM limit
    cap = _vmem_capacity_bytes()
    if vmem_budget_bytes is None:
        vmem_budget_bytes = max(8 * 1024 * 1024, cap // 3)
    TH = _pick_tile_h(N, H, W, C, Cout, citem, oitem,
                      vmem_budget_bytes, min_grid_steps)
    n_th = H // TH
    hb = TH // _HALO_BLK          # halo-block units per tile
    h8 = H // _HALO_BLK           # total 8-row blocks in the image

    est = _tile_vmem_bytes(TH, W, C, Cout, citem, oitem)
    vmem_limit = int(min(cap - 2 * 1024 * 1024,
                         max(2 * est, 32 * 1024 * 1024)))

    cost = pl.CostEstimate(
        flops=2 * N * H * W * KSIZE * KSIZE * C * Cout,
        transcendentals=0,
        bytes_accessed=int(N * H * W * C * 4 + w_flat.size * citem
                           + N * H * W * Cout * oitem))

    conv_out = pl.pallas_call(
        _upsample_conv_prelu_kernel,
        out_shape=jax.ShapeDtypeStruct((N, H, W, Cout), inter_dtype),
        grid=(N, n_th),
        in_specs=[
            # current tile rows
            pl.BlockSpec((1, TH, W, C), lambda n, t: (n, t, 0, 0)),
            # 8-row block directly above the tile (clamped at the top edge)
            pl.BlockSpec((1, _HALO_BLK, W, C),
                         lambda n, t: (n, jnp.maximum(t * hb - 1, 0), 0, 0)),
            # 8-row block directly below the tile (clamped at the bottom edge)
            pl.BlockSpec((1, _HALO_BLK, W, C),
                         lambda n, t: (n, jnp.minimum((t + 1) * hb, h8 - 1), 0, 0)),
            # im2col weights / bias: whole, reused every grid step
            pl.BlockSpec((KSIZE * KSIZE * C, Cout), lambda n, t: (0, 0)),
            pl.BlockSpec((1, Cout), lambda n, t: (0, 0)),
            # shared PReLU slope as an SMEM scalar
            pl.BlockSpec(memory_space=pltpu.MemorySpace.SMEM),
        ],
        out_specs=pl.BlockSpec((1, TH, W, Cout), lambda n, t: (n, t, 0, 0)),
        compiler_params=pltpu.CompilerParams(
            dimension_semantics=("parallel", "parallel"),
            vmem_limit_bytes=vmem_limit),
        cost_estimate=cost,
    )(x_nhwc, x_nhwc, x_nhwc, w_flat, b2, a1)

    # --- glue: PixelShuffle(2) + NHWC->NCHW fused into ONE XLA transpose
    # (the cast back to the input dtype fuses into the same copy pass).
    # conv_out channel index is c*scale^2 + i*scale + j (PyTorch ordering).
    r = scale
    y = conv_out.reshape(N, H, W, C, r, r)
    y = jnp.transpose(y, (0, 3, 1, 4, 2, 5))                     # (N, C, H, r, W, r)
    return y.reshape(N, C, H * r, W * r).astype(x_nchw.dtype)


def _reference(x_nchw, weight_oihw, bias, prelu_a, scale=SCALE, precision=None):
    xp = jnp.pad(x_nchw, ((0, 0), (0, 0), (1, 1), (1, 1)), mode="edge")
    y = lax.conv_general_dilated(
        xp, weight_oihw, window_strides=(1, 1), padding="VALID",
        dimension_numbers=("NCHW", "OIHW", "NCHW"), precision=precision)
    y = y + bias[None, :, None, None]
    N, CR, H, W = y.shape
    r = scale
    C = CR // (r * r)
    y = y.reshape(N, C, r, r, H, W).transpose(0, 1, 4, 2, 5, 3).reshape(
        N, C, H * r, W * r)
    return jnp.where(y >= 0, y, prelu_a * y)


if __name__ == "__main__":
    key = jax.random.PRNGKey(0)
    k_x, k_w, k_b = jax.random.split(key, 3)

    N, C, H, W = 2, 4, 16, 16
    Cout = C * SCALE * SCALE

    x = jax.random.normal(k_x, (N, C, H, W), jnp.float32)
    # deterministic synthetic parameters (same shapes as nn.Conv2d / nn.PReLU)
    fan_in = C * KSIZE * KSIZE
    bound = 1.0 / (fan_in ** 0.5)
    weight = jax.random.uniform(k_w, (Cout, C, KSIZE, KSIZE), jnp.float32,
                                minval=-bound, maxval=bound)
    bias = jax.random.uniform(k_b, (Cout,), jnp.float32,
                              minval=-bound, maxval=bound)
    prelu_a = jnp.float32(0.25)   # nn.PReLU() default init

    ref = _reference(x, weight, bias, prelu_a,
                     precision=lax.Precision.HIGHEST)

    # exact-precision check (f32 MXU path, HIGHEST precision)
    out_f32 = jax.block_until_ready(
        upsample_block(x, weight, bias, prelu_a, compute_dtype=jnp.float32))
    assert out_f32.shape == (N, C, H * SCALE, W * SCALE)
    assert jnp.allclose(out_f32, ref, atol=1e-4, rtol=1e-4)

    # default bf16-MXU path (f32 accumulation, bf16 intermediate) - looser tol
    out_bf16 = jax.block_until_ready(
        upsample_block(x, weight, bias, prelu_a, compute_dtype=jnp.bfloat16))
    assert out_bf16.shape == (N, C, H * SCALE, W * SCALE)
    assert jnp.allclose(out_bf16, ref, atol=3e-2, rtol=3e-2)

    print("KERNEL_OK")
</pallas_src>

<mosaic_0001>
module attributes {stable_mosaic.version = 11 : i64} {
  func.func @_upsample_conv_prelu_kernel(%arg0: i32, %arg1: i32, %arg2: memref<1x8x16x4xf32, #tpu.memory_space<vmem>>, %arg3: memref<1x8x16x4xf32, #tpu.memory_space<vmem>>, %arg4: memref<1x8x16x4xf32, #tpu.memory_space<vmem>>, %arg5: memref<36x16xf32, #tpu.memory_space<vmem>>, %arg6: memref<1x16xf32, #tpu.memory_space<vmem>>, %arg7: memref<1xf32, #tpu.memory_space<smem>>, %arg8: memref<1x8x16x16xf32, #tpu.memory_space<vmem>>) attributes {dimension_semantics = [#tpu.dimension_semantics<parallel>, #tpu.dimension_semantics<parallel>], iteration_bounds = array<i64: 2, 2>, scalar_prefetch = 0 : i64, scratch_operands = 0 : i64, tpu.core_type = #tpu.core_type<tc>, window_params = [{transform_indices = @transform_0, window_bounds = array<i64: 1, 8, 16, 4>}, {transform_indices = @transform_1, window_bounds = array<i64: 1, 8, 16, 4>}, {transform_indices = @transform_2, window_bounds = array<i64: 1, 8, 16, 4>}, {pipeline_mode = #tpu.pipeline_mode<synchronous>, transform_indices = @transform_3, window_bounds = array<i64: 36, 16>}, {pipeline_mode = #tpu.pipeline_mode<synchronous>, transform_indices = @transform_4, window_bounds = array<i64: 1, 16>}, {transform_indices = @transform_5, window_bounds = array<i64: 1>}, {transform_indices = @transform_6, window_bounds = array<i64: 1, 8, 16, 16>}]} {
    %c0 = arith.constant 0 : index
    %c0_0 = arith.constant 0 : index
    %c0_1 = arith.constant 0 : index
    %c0_2 = arith.constant 0 : index
    %0 = vector.load %arg2[%c0, %c0_0, %c0_1, %c0_2] : memref<1x8x16x4xf32, #tpu.memory_space<vmem>>, vector<1x8x16x4xf32>
    %1 = vector.shape_cast %0 : vector<1x8x16x4xf32> to vector<8x16x4xf32>
    %c0_3 = arith.constant 0 : index
    %c7 = arith.constant 7 : index
    %c0_4 = arith.constant 0 : index
    %c0_5 = arith.constant 0 : index
    %2 = vector.load %arg3[%c0_3, %c7, %c0_4, %c0_5] : memref<1x8x16x4xf32, #tpu.memory_space<vmem>>, vector<1x1x16x4xf32>
    %3 = vector.shape_cast %2 : vector<1x1x16x4xf32> to vector<1x16x4xf32>
    %c0_6 = arith.constant 0 : index
    %c0_7 = arith.constant 0 : index
    %c0_8 = arith.constant 0 : index
    %c0_9 = arith.constant 0 : index
    %4 = vector.load %arg4[%c0_6, %c0_7, %c0_8, %c0_9] : memref<1x8x16x4xf32, #tpu.memory_space<vmem>>, vector<1x1x16x4xf32>
    %5 = vector.shape_cast %4 : vector<1x1x16x4xf32> to vector<1x16x4xf32>
    %c0_i32 = arith.constant 0 : i32
    %6 = arith.cmpi eq, %arg1, %c0_i32 : i32
    %7 = vector.extract_strided_slice %1 {offsets = [0, 0, 0], sizes = [1, 16, 4], strides = [1, 1, 1]} : vector<8x16x4xf32> to vector<1x16x4xf32>
    %8 = arith.select %6, %7, %3 : vector<1x16x4xf32>
    %c1_i32 = arith.constant 1 : i32
    %9 = arith.cmpi eq, %arg1, %c1_i32 : i32
    %10 = vector.extract_strided_slice %1 {offsets = [7, 0, 0], sizes = [1, 16, 4], strides = [1, 1, 1]} : vector<8x16x4xf32> to vector<1x16x4xf32>
    %11 = arith.select %9, %10, %5 : vector<1x16x4xf32>
    %12 = tpu.concatenate %8, %1, %11 in 0 : vector<1x16x4xf32>, vector<8x16x4xf32>, vector<1x16x4xf32> -> vector<10x16x4xf32>
    %13 = tpu.iota {dimensions = array<i32: 1>} : vector<10x16x4xi32>
    %c0_i32_10 = arith.constant 0 : i32
    %14 = vector.broadcast %c0_i32_10 : i32 to vector<10x16x4xi32>
    %15 = arith.cmpi eq, %13, %14 : vector<10x16x4xi32>
    %c1_i32_11 = arith.constant 1 : i32
    %16 = tpu.dynamic_rotate %12 by %c1_i32_11 dim 1 : vector<10x16x4xf32>, i32 -> vector<10x16x4xf32>
    %17 = arith.select %15, %12, %16 : vector<10x16x4xi1>, vector<10x16x4xf32>
    %c15_i32 = arith.constant 15 : i32
    %18 = vector.broadcast %c15_i32 : i32 to vector<10x16x4xi32>
    %19 = arith.cmpi eq, %13, %18 : vector<10x16x4xi32>
    %c15_i32_12 = arith.constant 15 : i32
    %20 = tpu.dynamic_rotate %12 by %c15_i32_12 dim 1 : vector<10x16x4xf32>, i32 -> vector<10x16x4xf32>
    %21 = arith.select %19, %12, %20 : vector<10x16x4xi1>, vector<10x16x4xf32>
    %22 = vector.extract_strided_slice %17 {offsets = [0, 0, 0], sizes = [8, 16, 4], strides = [1, 1, 1]} : vector<10x16x4xf32> to vector<8x16x4xf32>
    %23 = vector.extract_strided_slice %12 {offsets = [0, 0, 0], sizes = [8, 16, 4], strides = [1, 1, 1]} : vector<10x16x4xf32> to vector<8x16x4xf32>
    %24 = vector.extract_strided_slice %21 {offsets = [0, 0, 0], sizes = [8, 16, 4], strides = [1, 1, 1]} : vector<10x16x4xf32> to vector<8x16x4xf32>
    %25 = vector.extract_strided_slice %17 {offsets = [1, 0, 0], sizes = [8, 16, 4], strides = [1, 1, 1]} : vector<10x16x4xf32> to vector<8x16x4xf32>
    %26 = vector.extract_strided_slice %12 {offsets = [1, 0, 0], sizes = [8, 16, 4], strides = [1, 1, 1]} : vector<10x16x4xf32> to vector<8x16x4xf32>
    %27 = vector.extract_strided_slice %21 {offsets = [1, 0, 0], sizes = [8, 16, 4], strides = [1, 1, 1]} : vector<10x16x4xf32> to vector<8x16x4xf32>
    %28 = vector.extract_strided_slice %17 {offsets = [2, 0, 0], sizes = [8, 16, 4], strides = [1, 1, 1]} : vector<10x16x4xf32> to vector<8x16x4xf32>
    %29 = vector.extract_strided_slice %12 {offsets = [2, 0, 0], sizes = [8, 16, 4], strides = [1, 1, 1]} : vector<10x16x4xf32> to vector<8x16x4xf32>
    %30 = vector.extract_strided_slice %21 {offsets = [2, 0, 0], sizes = [8, 16, 4], strides = [1, 1, 1]} : vector<10x16x4xf32> to vector<8x16x4xf32>
    %31 = tpu.concatenate %22, %23, %24, %25, %26, %27, %28, %29, %30 in 2 : vector<8x16x4xf32>, vector<8x16x4xf32>, vector<8x16x4xf32>, vector<8x16x4xf32>, vector<8x16x4xf32>, vector<8x16x4xf32>, vector<8x16x4xf32>, vector<8x16x4xf32>, vector<8x16x4xf32> -> vector<8x16x36xf32>
    %32 = vector.shape_cast %31 : vector<8x16x36xf32> to vector<128x36xf32>
    %c0_13 = arith.constant 0 : index
    %c0_14 = arith.constant 0 : index
    %33 = vector.load %arg5[%c0_13, %c0_14] : memref<36x16xf32, #tpu.memory_space<vmem>>, vector<36x16xf32>
    %cst = arith.constant dense<0.000000e+00> : vector<128x16xf32>
    %34 = tpu.matmul %32, %33, %cst {dimension_numbers = #tpu.dot_dimension_numbers<[1], [0], [0], [1], [0, 0, 1, 1], [], []>, precision = #tpu.contract_precision<fp32>} : vector<128x36xf32>, vector<36x16xf32>, vector<128x16xf32> -> vector<128x16xf32>
    %c0_15 = arith.constant 0 : index
    %c0_16 = arith.constant 0 : index
    %35 = vector.load %arg6[%c0_15, %c0_16] : memref<1x16xf32, #tpu.memory_space<vmem>>, vector<1x16xf32>
    %36 = vector.broadcast %35 : vector<1x16xf32> to vector<128x16xf32>
    %37 = arith.addf %34, %36 : vector<128x16xf32>
    %cst_17 = arith.constant 0.000000e+00 : f32
    %38 = vector.broadcast %cst_17 : f32 to vector<128x16xf32>
    %39 = arith.cmpf oge, %37, %38 : vector<128x16xf32>
    %c0_18 = arith.constant 0 : index
    %40 = memref.load %arg7[%c0_18] : memref<1xf32, #tpu.memory_space<smem>>
    %41 = vector.broadcast %40 : f32 to vector<128x16xf32>
    %42 = arith.mulf %41, %37 : vector<128x16xf32>
    %43 = arith.select %39, %37, %42 : vector<128x16xi1>, vector<128x16xf32>
    %44 = vector.shape_cast %43 : vector<128x16xf32> to vector<1x8x16x16xf32>
    %c0_19 = arith.constant 0 : index
    %c0_20 = arith.constant 0 : index
    %c0_21 = arith.constant 0 : index
    %c0_22 = arith.constant 0 : index
    %45 = vector.load %arg8[%c0_19, %c0_20, %c0_21, %c0_22] : memref<1x8x16x16xf32, #tpu.memory_space<vmem>>, vector<1x8x16x16xf32>
    tpu.vector_store %arg8[%c0_19, %c0_20, %c0_21, %c0_22], %44 {strides = array<i32>} : memref<1x8x16x16xf32, #tpu.memory_space<vmem>>, vector<1x8x16x16xf32>,
    return
  }
  func.func @transform_0(%arg0: i32, %arg1: i32) -> (i32, i32, i32, i32) {
    %c0_i32 = arith.constant 0 : i32
    %c0_i32_0 = arith.constant 0 : i32
    %c0_i32_1 = arith.constant 0 : i32
    return %arg0, %arg1, %c0_i32, %c0_i32_0 : i32, i32, i32, i32
  }
  func.func @transform_1(%arg0: i32, %arg1: i32) -> (i32, i32, i32, i32) {
    %c1_i32 = arith.constant 1 : i32
    %0 = arith.muli %arg1, %c1_i32 : i32
    %c1_i32_0 = arith.constant 1 : i32
    %1 = arith.subi %0, %c1_i32_0 : i32
    %c0_i32 = arith.constant 0 : i32
    %2 = arith.maxsi %1, %c0_i32 : i32
    %c0_i32_1 = arith.constant 0 : i32
    %c0_i32_2 = arith.constant 0 : i32
    %c0_i32_3 = arith.constant 0 : i32
    return %arg0, %2, %c0_i32_1, %c0_i32_2 : i32, i32, i32, i32
  }
  func.func @transform_2(%arg0: i32, %arg1: i32) -> (i32, i32, i32, i32) {
    %c1_i32 = arith.constant 1 : i32
    %0 = arith.addi %arg1, %c1_i32 : i32
    %c1_i32_0 = arith.constant 1 : i32
    %1 = arith.muli %0, %c1_i32_0 : i32
    %c1_i32_1 = arith.constant 1 : i32
    %2 = arith.minsi %1, %c1_i32_1 : i32
    %c0_i32 = arith.constant 0 : i32
    %c0_i32_2 = arith.constant 0 : i32
    %c0_i32_3 = arith.constant 0 : i32
    return %arg0, %2, %c0_i32, %c0_i32_2 : i32, i32, i32, i32
  }
  func.func @transform_3(%arg0: i32, %arg1: i32) -> (i32, i32) {
    %c0_i32 = arith.constant 0 : i32
    %c0_i32_0 = arith.constant 0 : i32
    %c0_i32_1 = arith.constant 0 : i32
    return %c0_i32, %c0_i32_0 : i32, i32
  }
  func.func @transform_4(%arg0: i32, %arg1: i32) -> (i32, i32) {
    %c0_i32 = arith.constant 0 : i32
    %c0_i32_0 = arith.constant 0 : i32
    %c0_i32_1 = arith.constant 0 : i32
    return %c0_i32, %c0_i32_0 : i32, i32
  }
  func.func @transform_5(%arg0: i32, %arg1: i32) -> i32 {
    %c0_i32 = arith.constant 0 : i32
    %c0_i32_0 = arith.constant 0 : i32
    return %c0_i32 : i32
  }
  func.func @transform_6(%arg0: i32, %arg1: i32) -> (i32, i32, i32, i32) {
    %c0_i32 = arith.constant 0 : i32
    %c0_i32_0 = arith.constant 0 : i32
    %c0_i32_1 = arith.constant 0 : i32
    return %arg0, %arg1, %c0_i32, %c0_i32_0 : i32, i32, i32, i32
  }
}

</mosaic_0001>

<llo_original>
// kernel: tpu_custom_call.1
$region0: #{tpu_custom_call.1}
  #allocation0 [shape = 'u32[]', space=smem, size = 0x4, offset = 0x4, fixed_abs, tag = 'smem constant byte address 0x4 - core index']
  #allocation1 [shape = 'u32[144,128]{1,0:T(1,128)}', space=vmem, size = 0x12000, scoped, tag = 'internal scratch']
  #allocation2 [shape = 'f32[1]{0:T(128)S(6)}', space=smem, size = 0x200, scoped, tag = 'scoped memory for tpu_custom_call.1']
  %s0 = inlined_call_operand.vmem [shape: f32[2,16,16,4], index: 0, kind: input, shape index: {}]
  %s1 = inlined_call_operand.vmem [shape: f32[2,16,16,4], index: 1, kind: input, shape index: {}]
  %s2 = inlined_call_operand.vmem [shape: f32[2,16,16,4], index: 2, kind: input, shape index: {}]
  %s3 = inlined_call_operand.vmem [shape: f32[36,16], index: 3, kind: input, shape index: {}]
  %s4 = inlined_call_operand.vmem [shape: f32[1,16], index: 4, kind: input, shape index: {}]
  %s5 = inlined_call_operand.<no memory space> [shape: f32[1], index: 5, kind: input, shape index: {}]
  %s6 = inlined_call_operand.hbm [shape: f32[2,16,16,16], index: 6, kind: output, shape index: {}]
  %s7 = sld [smem:[#allocation0]]
  $region57: #{tpu_custom_call.1} parent=0
    _
  %s9 = ssub.s32 1, %s7
  %s10 = scalar_select 0, %s9, %s7
  %11 = sst [smem:[#allocation2]] %s5
  $region1: #{tpu_custom_call.1} parent=0
    #allocation3 [shape = 'u8[131072]{0}', space=vmem, size = 0x20000, scoped, tag = 'output window, operand 0']
    #allocation4 [shape = 's32[2]{0}', space=sflag, size = 0x8, scoped, tag = 'scoped memory for tpu_custom_call.1']
    %12 = vsyncpa [#allocation4], 0
    %s13 = scalar_lea.sflag [#allocation4], 1
    %14 = vsyncpa %s13, 0
    loop: start=0, step=1, limit=6
    $region2: #{tpu_custom_call.1} parent=1 // loop_pre_header
      _
    $region3: #{tpu_custom_call.1} parent=1 // loop_header
      %s16 = sphi 0, %s20
      %p17 = scmp.ge.s32.totalorder %s16, 6
      %s23 = sphi 0, %s35
      %s24 = sphi 0, %s31
      %s25 = sphi 0, %s23
      %s26 = sphi 0, %s24
      %s27 = sphi 0, %s25
      %s28 = sphi 0, %s26
      %s40 = sphi 0, %s42
      %s43 = sphi 0, %s40
      %s44 = sphi 0, %s43
      %s60 = sphi 0, %s44
      %s74 = sphi 0, %s76
      %s77 = sphi 0, %s74
      %s78 = sphi 0, %s77
      %s94 = sphi 0, %s78
      %s108 = sphi 0, %s110
      %s111 = sphi 0, %s108
      %s112 = sphi 0, %s111
      %s128 = sphi 0, %s112
      %s132 = sphi 0, %s132
      %s134 = sphi 0, %s132
      %s135 = sphi 0, %s134
      %s149 = sphi 0, %s135
      %s153 = sphi 0, %s153
      %s155 = sphi 0, %s153
      %s156 = sphi 0, %s155
      %s170 = sphi 0, %s156
      %s174 = sphi 0, %s174
      %s176 = sphi 0, %s174
      %s177 = sphi 0, %s176
      %s191 = sphi 0, %s177
      %s199 = sphi 0, %s201
      %s202 = sphi 0, %s199
      %s203 = sphi 0, %s202
      %s219 = sphi 0, %s203
    $region4: #{tpu_custom_call.1} parent=1 // loop_header_branch
      %19 = sbr.rel (%p17) target = $region8
    $region5: #{tpu_custom_call.1} parent=1 // loop_body
      %s21 = ssub.s32 %s16, 1
      %s22 = ssub.s32 %s16, 2
      %s29 = sadd.s32 1, %s24
      %p30 = scmp.ge.s32.totalorder %s29, 2
      %s31 = scalar_select %p30, 0, %s29
      %s32 = sadd.s32 1, %s23
      %s33 = scalar_select %p30, %s32, %s23
      %p34 = scmp.ge.s32.totalorder %s33, 2
      %s35 = scalar_select %p34, 0, %s33
      %s36 = ssub.s32 %s23, %s35
      %s37 = ssub.s32 %s24, %s31
      %s38 = sor.u32 %s36, %s37
      %p39 = scmp.eq.s32.totalorder %s38, 0
      %s41 = sadd.s32 %s40, 1
      %s42 = scalar_select %p39, %s40, %s41
      %p45 = pneg %p39
      %p46 = scmp.eq.s32.totalorder %s16, 3
      %p47 = por %p45, %p46
      %p48 = scmp.ne.s32.totalorder %s40, %s43
      %p49 = scmp.eq.s32.totalorder %s16, 0
      %p50 = por %p48, %p49
      %p51 = scmp.ne.s32.totalorder %s40, %s43
      %p52 = scmp.eq.s32.totalorder %s21, 3
      %p53 = por %p51, %p52
      %p54 = scmp.ne.s32.totalorder %s43, %s44
      %p55 = scmp.eq.s32.totalorder %s21, 0
      %p56 = por %p54, %p55
      %p57 = scmp.ne.s32.totalorder %s43, %s44
      %p58 = scmp.eq.s32.totalorder %s22, 3
      %p59 = por %p57, %p58
      %p61 = scmp.ne.s32.totalorder %s44, %s60
      %p62 = scmp.eq.s32.totalorder %s22, 0
      %p63 = por %p61, %p62
      %s64 = ssub.s32 %s24, 1
      %p65 = scmp.gt.s32.totalorder %s64, 0
      %s66 = scalar_select %p65, %s64, 0
      %s67 = ssub.s32 %s31, 1
      %p68 = scmp.gt.s32.totalorder %s67, 0
      %s69 = scalar_select %p68, %s67, 0
      %s70 = ssub.s32 %s23, %s35
      %s71 = ssub.s32 %s66, %s69
      %s72 = sor.u32 %s70, %s71
      %p73 = scmp.eq.s32.totalorder %s72, 0
      %s75 = sadd.s32 %s74, 1
      %s76 = scalar_select %p73, %s74, %s75
      %p79 = pneg %p73
      %p80 = scmp.eq.s32.totalorder %s16, 3
      %p81 = por %p79, %p80
      %p82 = scmp.ne.s32.totalorder %s74, %s77
      %p83 = scmp.eq.s32.totalorder %s16, 0
      %p84 = por %p82, %p83
      %p85 = scmp.ne.s32.totalorder %s74, %s77
      %p86 = scmp.eq.s32.totalorder %s21, 3
      %p87 = por %p85, %p86
      %p88 = scmp.ne.s32.totalorder %s77, %s78
      %p89 = scmp.eq.s32.totalorder %s21, 0
      %p90 = por %p88, %p89
      %p91 = scmp.ne.s32.totalorder %s77, %s78
      %p92 = scmp.eq.s32.totalorder %s22, 3
      %p93 = por %p91, %p92
      %p95 = scmp.ne.s32.totalorder %s78, %s94
      %p96 = scmp.eq.s32.totalorder %s22, 0
      %p97 = por %p95, %p96
      %s98 = sadd.s32 %s24, 1
      %p99 = scmp.lt.s32.totalorder %s98, 1
      %s100 = scalar_select %p99, %s98, 1
      %s101 = sadd.s32 %s31, 1
      %p102 = scmp.lt.s32.totalorder %s101, 1
      %s103 = scalar_select %p102, %s101, 1
      %s104 = ssub.s32 %s23, %s35
      %s105 = ssub.s32 %s100, %s103
      %s106 = sor.u32 %s104, %s105
      %p107 = scmp.eq.s32.totalorder %s106, 0
      %s109 = sadd.s32 %s108, 1
      %s110 = scalar_select %p107, %s108, %s109
      %p113 = pneg %p107
      %p114 = scmp.eq.s32.totalorder %s16, 3
      %p115 = por %p113, %p114
      %p116 = scmp.ne.s32.totalorder %s108, %s111
      %p117 = scmp.eq.s32.totalorder %s16, 0
      %p118 = por %p116, %p117
      %p119 = scmp.ne.s32.totalorder %s108, %s111
      %p120 = scmp.eq.s32.totalorder %s21, 3
      %p121 = por %p119, %p120
      %p122 = scmp.ne.s32.totalorder %s111, %s112
      %p123 = scmp.eq.s32.totalorder %s21, 0
      %p124 = por %p122, %p123
      %p125 = scmp.ne.s32.totalorder %s111, %s112
      %p126 = scmp.eq.s32.totalorder %s22, 3
      %p127 = por %p125, %p126
      %p129 = scmp.ne.s32.totalorder %s112, %s128
      %p130 = scmp.eq.s32.totalorder %s22, 0
      %p131 = por %p129, %p130
      %s133 = sadd.s32 %s132, 1
      %p136 = scmp.eq.s32.totalorder %s16, 3
      %p137 = scmp.ne.s32.totalorder %s132, %s134
      %p138 = scmp.eq.s32.totalorder %s16, 0
      %p139 = por %p137, %p138
      %p140 = scmp.ne.s32.totalorder %s132, %s134
      %p141 = scmp.eq.s32.totalorder %s21, 3
      %p142 = por %p140, %p141
      %p143 = scmp.ne.s32.totalorder %s134, %s135
      %p144 = scmp.eq.s32.totalorder %s21, 0
      %p145 = por %p143, %p144
      %p146 = scmp.ne.s32.totalorder %s134, %s135
      %p147 = scmp.eq.s32.totalorder %s22, 3
      %p148 = por %p146, %p147
      %p150 = scmp.ne.s32.totalorder %s135, %s149
      %p151 = scmp.eq.s32.totalorder %s22, 0
      %p152 = por %p150, %p151
      %s154 = sadd.s32 %s153, 1
      %p157 = scmp.eq.s32.totalorder %s16, 3
      %p158 = scmp.ne.s32.totalorder %s153, %s155
      %p159 = scmp.eq.s32.totalorder %s16, 0
      %p160 = por %p158, %p159
      %p161 = scmp.ne.s32.totalorder %s153, %s155
      %p162 = scmp.eq.s32.totalorder %s21, 3
      %p163 = por %p161, %p162
      %p164 = scmp.ne.s32.totalorder %s155, %s156
      %p165 = scmp.eq.s32.totalorder %s21, 0
      %p166 = por %p164, %p165
      %p167 = scmp.ne.s32.totalorder %s155, %s156
      %p168 = scmp.eq.s32.totalorder %s22, 3
      %p169 = por %p167, %p168
      %p171 = scmp.ne.s32.totalorder %s156, %s170
      %p172 = scmp.eq.s32.totalorder %s22, 0
      %p173 = por %p171, %p172
      %s175 = sadd.s32 %s174, 1
      %p178 = scmp.eq.s32.totalorder %s16, 3
      %p179 = scmp.ne.s32.totalorder %s174, %s176
      %p180 = scmp.eq.s32.totalorder %s16, 0
      %p181 = por %p179, %p180
      %p182 = scmp.ne.s32.totalorder %s174, %s176
      %p183 = scmp.eq.s32.totalorder %s21, 3
      %p184 = por %p182, %p183
      %p185 = scmp.ne.s32.totalorder %s176, %s177
      %p186 = scmp.eq.s32.totalorder %s21, 0
      %p187 = por %p185, %p186
      %p188 = scmp.ne.s32.totalorder %s176, %s177
      %p189 = scmp.eq.s32.totalorder %s22, 3
      %p190 = por %p188, %p189
      %p192 = scmp.ne.s32.totalorder %s177, %s191
      %p193 = scmp.eq.s32.totalorder %s22, 0
      %p194 = por %p192, %p193
      %s195 = ssub.s32 %s23, %s35
      %s196 = ssub.s32 %s24, %s31
      %s197 = sor.u32 %s195, %s196
      %p198 = scmp.eq.s32.totalorder %s197, 0
      %s200 = sadd.s32 %s199, 1
      %s201 = scalar_select %p198, %s199, %s200
      %p204 = pneg %p198
      %p205 = scmp.eq.s32.totalorder %s16, 3
      %p206 = por %p204, %p205
      %p207 = scmp.ne.s32.totalorder %s199, %s202
      %p208 = scmp.eq.s32.totalorder %s16, 0
      %p209 = por %p207, %p208
      %p210 = scmp.ne.s32.totalorder %s199, %s202
      %p211 = scmp.eq.s32.totalorder %s21, 3
      %p212 = por %p210, %p211
      %p213 = scmp.ne.s32.totalorder %s202, %s203
      %p214 = scmp.eq.s32.totalorder %s21, 0
      %p215 = por %p213, %p214
      %p216 = scmp.ne.s32.totalorder %s202, %s203
      %p217 = scmp.eq.s32.totalorder %s22, 3
      %p218 = por %p216, %p217
      %p220 = scmp.ne.s32.totalorder %s203, %s219
      %p221 = scmp.eq.s32.totalorder %s22, 0
      %p222 = por %p220, %p221
      %p223 = scmp.le.s32.totalorder 1, %s16
      %p224 = scmp.lt.s32.totalorder %s16, 5
      %p225 = pnand %p223, %p224
      %p226 = pneg %p225
      // Predicated region
      $region9: #{tpu_custom_call.1} parent=5 // pred_check
        _
      $region10: #{tpu_custom_call.1} parent=5 // pred_check_branch
        %228 = sbr.rel (%p225) target = $region12
      $region11: #{tpu_custom_call.1} parent=5 // pred_region
        %s229 = ssub.s32 %s16, 1
        // Predicated region
        $region13: #{tpu_custom_call.1} parent=11 // pred_check
          %p230 = pneg %p145
        $region14: #{tpu_custom_call.1} parent=11 // pred_check_branch
          %232 = sbr.rel (%p230) target = $region16
        $region15: #{tpu_custom_call.1} parent=11 // pred_region
          _
        $region16: #{tpu_custom_call.1} parent=11 // pred_fallthru
          _
        // Predicated region
        $region17: #{tpu_custom_call.1} parent=11 // pred_check
          %p233 = pneg %p166
        $region18: #{tpu_custom_call.1} parent=11 // pred_check_branch
          %235 = sbr.rel (%p233) target = $region20
        $region19: #{tpu_custom_call.1} parent=11 // pred_region
          _
        $region20: #{tpu_custom_call.1} parent=11 // pred_fallthru
          _
        // Predicated region
        $region21: #{tpu_custom_call.1} parent=11 // pred_check
          %p236 = pneg %p187
        $region22: #{tpu_custom_call.1} parent=11 // pred_check_branch
          %238 = sbr.rel (%p236) target = $region24
        $region23: #{tpu_custom_call.1} parent=11 // pred_region
          _
        $region24: #{tpu_custom_call.1} parent=11 // pred_fallthru
          _
      $region12: #{tpu_custom_call.1} parent=5 // pred_fallthru
        _
      %p239 = scmp.lt.s32.totalorder %s16, 4
      // Predicated region
      $region25: #{tpu_custom_call.1} parent=5 // pred_check
        %p240 = pneg %p239
      $region26: #{tpu_custom_call.1} parent=5 // pred_check_branch
        %242 = sbr.rel (%p240) target = $region28
      $region27: #{tpu_custom_call.1} parent=5 // pred_region
        // Predicated region
        $region29: #{tpu_custom_call.1} parent=27 // pred_check
          %p243 = pneg %p50
        $region30: #{tpu_custom_call.1} parent=27 // pred_check_branch
          %245 = sbr.rel (%p243) target = $region32
        $region31: #{tpu_custom_call.1} parent=27 // pred_region
          %s246 = smul.u32 8, %s24
          %p247 = scmp.lt.s32.totalorder %s23, 1
          %s248 = scalar_select %p247, %s23, 1
          %p249 = scmp.lt.s32.totalorder %s246, 15
          %s250 = scalar_select %p249, %s246, 15
          %s251 = smul.addr %s250, 2
          %s252 = smul.addr %s248, 32
          %s253 = sadd.s32 %s251, %s252
          %s254 = smul.addr %s253, 8
          %s255 = scalar_lea.vmem %s0, %s254
          %s256 = smul.u32 8, %s24
        $region32: #{tpu_custom_call.1} parent=27 // pred_fallthru
          _
        // Predicated region
        $region33: #{tpu_custom_call.1} parent=27 // pred_check
          %p257 = pneg %p84
        $region34: #{tpu_custom_call.1} parent=27 // pred_check_branch
          %259 = sbr.rel (%p257) target = $region36
        $region35: #{tpu_custom_call.1} parent=27 // pred_region
          %s260 = ssub.s32 %s24, 1
          %p261 = scmp.gt.s32.totalorder %s260, 0
          %s262 = scalar_select %p261, %s260, 0
          %s263 = smul.u32 8, %s262
          %p264 = scmp.lt.s32.totalorder %s23, 1
          %s265 = scalar_select %p264, %s23, 1
          %p266 = scmp.lt.s32.totalorder %s263, 15
          %s267 = scalar_select %p266, %s263, 15
          %s268 = smul.addr %s267, 2
          %s269 = smul.addr %s265, 32
          %s270 = sadd.s32 %s268, %s269
          %s271 = smul.addr %s270, 8
          %s272 = scalar_lea.vmem %s1, %s271
          %s273 = ssub.s32 %s24, 1
          %p274 = scmp.gt.s32.totalorder %s273, 0
          %s275 = scalar_select %p274, %s273, 0
          %s276 = smul.u32 8, %s275
        $region36: #{tpu_custom_call.1} parent=27 // pred_fallthru
          _
        // Predicated region
        $region37: #{tpu_custom_call.1} parent=27 // pred_check
          %p277 = pneg %p118
        $region38: #{tpu_custom_call.1} parent=27 // pred_check_branch
          %279 = sbr.rel (%p277) target = $region40
        $region39: #{tpu_custom_call.1} parent=27 // pred_region
          %s280 = sadd.s32 %s24, 1
          %p281 = scmp.lt.s32.totalorder %s280, 1
          %s282 = scalar_select %p281, %s280, 1
          %s283 = smul.u32 8, %s282
          %p284 = scmp.lt.s32.totalorder %s23, 1
          %s285 = scalar_select %p284, %s23, 1
          %p286 = scmp.lt.s32.totalorder %s283, 15
          %s287 = scalar_select %p286, %s283, 15
          %s288 = smul.addr %s287, 2
          %s289 = smul.addr %s285, 32
          %s290 = sadd.s32 %s288, %s289
          %s291 = smul.addr %s290, 8
          %s292 = scalar_lea.vmem %s2, %s291
          %s293 = sadd.s32 %s24, 1
          %p294 = scmp.lt.s32.totalorder %s293, 1
          %s295 = scalar_select %p294, %s293, 1
          %s296 = smul.u32 8, %s295
        $region40: #{tpu_custom_call.1} parent=27 // pred_fallthru
          _
      $region28: #{tpu_custom_call.1} parent=5 // pred_fallthru
        _
      %p297 = scmp.le.s32.totalorder 1, %s16
      %p298 = scmp.lt.s32.totalorder %s16, 5
      %p299 = pnand %p297, %p298
      %p300 = pneg %p299
      // Predicated region
      $region41: #{tpu_custom_call.1} parent=5 // pred_check
        _
      $region42: #{tpu_custom_call.1} parent=5 // pred_check_branch
        %302 = sbr.rel (%p299) target = $region44
      $region43: #{tpu_custom_call.1} parent=5 // pred_region
        %s303 = ssub.s32 %s16, 1
        %s304 = smul.u32 8, %s26
        %p305 = scmp.lt.s32.totalorder %s25, 1
        %s306 = scalar_select %p305, %s25, 1
        %p307 = scmp.lt.s32.totalorder %s304, 15
        %s308 = scalar_select %p307, %s304, 15
        %s309 = smul.addr %s308, 2
        %s310 = smul.addr %s306, 32
        %s311 = sadd.s32 %s309, %s310
        %s312 = smul.addr %s311, 8
        %s313 = scalar_lea.vmem %s0, %s312
        %p314 = pneg %p56
        %p315 = pneg %p53
        %s316 = ssub.s32 %s26, 1
        %p317 = scmp.gt.s32.totalorder %s316, 0
        %s318 = scalar_select %p317, %s316, 0
        %s319 = smul.u32 8, %s318
        %p320 = scmp.lt.s32.totalorder %s25, 1
        %s321 = scalar_select %p320, %s25, 1
        %p322 = scmp.lt.s32.totalorder %s319, 15
        %s323 = scalar_select %p322, %s319, 15
        %s324 = smul.addr %s323, 2
        %s325 = smul.addr %s321, 32
        %s326 = sadd.s32 %s324, %s325
        %s327 = smul.addr %s326, 8
        %s328 = scalar_lea.vmem %s1, %s327
        %p329 = pneg %p90
        %p330 = pneg %p87
        %s331 = sadd.s32 %s26, 1
        %p332 = scmp.lt.s32.totalorder %s331, 1
        %s333 = scalar_select %p332, %s331, 1
        %s334 = smul.u32 8, %s333
        %p335 = scmp.lt.s32.totalorder %s25, 1
        %s336 = scalar_select %p335, %s25, 1
        %p337 = scmp.lt.s32.totalorder %s334, 15
        %s338 = scalar_select %p337, %s334, 15
        %s339 = smul.addr %s338, 2
        %s340 = smul.addr %s336, 32
        %s341 = sadd.s32 %s339, %s340
        %s342 = smul.addr %s341, 8
        %s343 = scalar_lea.vmem %s2, %s342
        %p344 = pneg %p124
        %p345 = pneg %p121
        %p346 = pneg %p145
        %p347 = pneg %p142
        %p348 = pneg %p166
        %p349 = pneg %p163
        %p350 = pneg %p187
        %p351 = pneg %p184
        %p352 = pneg %p215
        %p353 = pneg %p212
        %s354 = sand.u32 %s202, 1
        %s355 = scalar_lea.sflag [#allocation4], %s354
        %s356 = sand.u32 %s202, 1
        %s357 = smul.addr %s356, 128
        %s358 = scalar_lea.vmem [#allocation3], %s357
        %s359 = smul.u32 8, %s26
        %p360 = scmp.lt.s32.totalorder %s25, 1
        %s361 = scalar_select %p360, %s25, 1
        %p362 = scmp.lt.s32.totalorder %s359, 15
        %s363 = scalar_select %p362, %s359, 15
        %s364 = smul.addr %s363, 2
        %s365 = smul.addr %s361, 32
        %s366 = sadd.s32 %s364, %s365
        %s367 = smul.addr %s366, 8
        %s368 = scalar_lea.vmem %s0, %s367
        %s369 = smul.u32 8, %s26
        %s370 = ssub.s32 %s26, 1
        %p371 = scmp.gt.s32.totalorder %s370, 0
        %s372 = scalar_select %p371, %s370, 0
        %s373 = smul.u32 8, %s372
        %p374 = scmp.lt.s32.totalorder %s25, 1
        %s375 = scalar_select %p374, %s25, 1
        %p376 = scmp.lt.s32.totalorder %s373, 15
        %s377 = scalar_select %p376, %s373, 15
        %s378 = smul.addr %s377, 2
        %s379 = smul.addr %s375, 32
        %s380 = sadd.s32 %s378, %s379
        %s381 = smul.addr %s380, 8
        %s382 = scalar_lea.vmem %s1, %s381
        %s383 = ssub.s32 %s26, 1
        %p384 = scmp.gt.s32.totalorder %s383, 0
        %s385 = scalar_select %p384, %s383, 0
        %s386 = smul.u32 8, %s385
        %s387 = sadd.s32 %s26, 1
        %p388 = scmp.lt.s32.totalorder %s387, 1
        %s389 = scalar_select %p388, %s387, 1
        %s390 = smul.u32 8, %s389
        %p391 = scmp.lt.s32.totalorder %s25, 1
        %s392 = scalar_select %p391, %s25, 1
        %p393 = scmp.lt.s32.totalorder %s390, 15
        %s394 = scalar_select %p393, %s390, 15
        %s395 = smul.addr %s394, 2
        %s396 = smul.addr %s392, 32
        %s397 = sadd.s32 %s395, %s396
        %s398 = smul.addr %s397, 8
        %s399 = scalar_lea.vmem %s2, %s398
        %s400 = sadd.s32 %s26, 1
        %p401 = scmp.lt.s32.totalorder %s400, 1
        %s402 = scalar_select %p401, %s400, 1
        %s403 = smul.u32 8, %s402
        %s404 = smul.u32 8, %s26
        %v405 = vld [vmem:[%s368] sm:$0xff]
        %v406 = vld [vmem:[%s368 + $0x8] sm:$0xff]
        %v407 = vld [vmem:[%s368 + $0x10] sm:$0xff]
        %v408 = vld [vmem:[%s368 + $0x18] sm:$0xff]
        %v409 = vld [vmem:[%s368 + $0x20] sm:$0xff]
        %v410 = vld [vmem:[%s368 + $0x28] sm:$0xff]
        %v411 = vld [vmem:[%s368 + $0x30] sm:$0xff]
        %v412 = vld [vmem:[%s368 + $0x38] sm:$0xff]
        %v413 = vld [vmem:[%s368 + $0x40] sm:$0xff]
        %v414 = vld [vmem:[%s368 + $0x48] sm:$0xff]
        %v415 = vld [vmem:[%s368 + $0x50] sm:$0xff]
        %v416 = vld [vmem:[%s368 + $0x58] sm:$0xff]
        %v417 = vld [vmem:[%s368 + $0x60] sm:$0xff]
        %v418 = vld [vmem:[%s368 + $0x68] sm:$0xff]
        %v419 = vld [vmem:[%s368 + $0x70] sm:$0xff]
        %v420 = vld [vmem:[%s368 + $0x78] sm:$0xff]
        %s421 = scalar_lea.vmem %s382, 112
        %v422 = vld [vmem:[%s421] sm:$0xff]
        %v423 = vld [vmem:[%s421 + $0x8] sm:$0xff]
        %v424 = vld [vmem:[%s399] sm:$0xff]
        %v425 = vld [vmem:[%s399 + $0x8] sm:$0xff]
        %p426 = scmp.eq.s32.totalorder %s26, 0
        %s427 = scalar_select %p426, 1, 0
        %v428 = vstv %s427
        %vm429 = vcmp.eq.s32.totalorder %v428, 1
        %v430 = vsel %vm429, %v405, %v422
        %v431 = vsel %vm429, %v406, %v423
        %p432 = scmp.eq.s32.totalorder %s26, 1
        %s433 = scalar_select %p432, 1, 0
        %v434 = vstv %s433
        %vm435 = vcmp.eq.s32.totalorder %v434, 1
        %v436 = vsel %vm435, %v419, %v424
        %v437 = vsel %vm435, %v420, %v425
        %v438 = vlaneseq
        %v439 = vshrl.u32 %v438, 7
        %v440 = vadd.s32 %v439, 8
        %vm441 = vcmp.eq.s32.totalorder %v439, 0
        %vm442 = vcmp.eq.s32.totalorder %v440, 0
        %v443 = vrot.slane %v430, 7
        %v444 = vrot.slane %v405, 7
        %v445 = vrot.slane %v407, 7
        %v446 = vrot.slane %v409, 7
        %v447 = vrot.slane %v411, 7
        %v448 = vrot.slane %v413, 7
        %v449 = vrot.slane %v415, 7
        %v450 = vrot.slane %v417, 7
        %v451 = vrot.slane %v419, 7
        %v452 = vrot.slane %v436, 7
        %v453 = vrot.slane %v431, 7
        %v454 = vrot.slane %v406, 7
        %v455 = vrot.slane %v408, 7
        %v456 = vrot.slane %v410, 7
        %v457 = vrot.slane %v412, 7
        %v458 = vrot.slane %v414, 7
        %v459 = vrot.slane %v416, 7
        %v460 = vrot.slane %v418, 7
        %v461 = vrot.slane %v420, 7
        %v462 = vrot.slane %v437, 7
        %vm463 = vcmp.lt.s32.totalorder %v439, 1
        %v464 = vsel %vm463, %v443, %v453
        %v465 = vsel %vm463, %v444, %v454
        %v466 = vsel %vm463, %v445, %v455
        %v467 = vsel %vm463, %v446, %v456
        %v468 = vsel %vm463, %v447, %v457
        %v469 = vsel %vm463, %v448, %v458
        %v470 = vsel %vm463, %v449, %v459
        %v471 = vsel %vm463, %v450, %v460
        %v472 = vsel %vm463, %v451, %v461
        %v473 = vsel %vm463, %v452, %v462
        %v474 = vsel %vm463, %v453, %v443
        %v475 = vsel %vm463, %v454, %v444
        %v476 = vsel %vm463, %v455, %v445
        %v477 = vsel %vm463, %v456, %v446
        %v478 = vsel %vm463, %v457, %v447
        %v479 = vsel %vm463, %v458, %v448
        %v480 = vsel %vm463, %v459, %v449
        %v481 = vsel %vm463, %v460, %v450
        %v482 = vsel %vm463, %v461, %v451
        %v483 = vsel %vm463, %v462, %v452
        %v484 = vsel %vm441, %v430, %v474
        %v485 = vsel %vm442, %v431, %v464
        %v486 = vsel %vm441, %v405, %v475
        %v487 = vsel %vm442, %v406, %v465
        %v488 = vsel %vm441, %v407, %v476
        %v489 = vsel %vm442, %v408, %v466
        %v490 = vsel %vm441, %v409, %v477
        %v491 = vsel %vm442, %v410, %v467
        %v492 = vsel %vm441, %v411, %v478
        %v493 = vsel %vm442, %v412, %v468
        %v494 = vsel %vm441, %v413, %v479
        %v495 = vsel %vm442, %v414, %v469
        %v496 = vsel %vm441, %v415, %v480
        %v497 = vsel %vm442, %v416, %v470
        %v498 = vsel %vm441, %v417, %v481
        %v499 = vsel %vm442, %v418, %v471
        %v500 = vsel %vm441, %v419, %v482
        %v501 = vsel %vm442, %v420, %v472
        %v502 = vsel %vm441, %v436, %v483
        %v503 = vsel %vm442, %v437, %v473
        %vm504 = vcmp.eq.s32.totalorder %v439, 15
        %vm505 = vcmp.eq.s32.totalorder %v440, 15
        %v506 = vrot.slane %v430, 1
        %v507 = vrot.slane %v405, 1
        %v508 = vrot.slane %v407, 1
        %v509 = vrot.slane %v409, 1
        %v510 = vrot.slane %v411, 1
        %v511 = vrot.slane %v413, 1
        %v512 = vrot.slane %v415, 1
        %v513 = vrot.slane %v417, 1
        %v514 = vrot.slane %v419, 1
        %v515 = vrot.slane %v436, 1
        %v516 = vrot.slane %v431, 1
        %v517 = vrot.slane %v406, 1
        %v518 = vrot.slane %v408, 1
        %v519 = vrot.slane %v410, 1
        %v520 = vrot.slane %v412, 1
        %v521 = vrot.slane %v414, 1
        %v522 = vrot.slane %v416, 1
        %v523 = vrot.slane %v418, 1
        %v524 = vrot.slane %v420, 1
        %v525 = vrot.slane %v437, 1
        %vm526 = vcmp.lt.s32.totalorder %v439, 7
        %v527 = vsel %vm526, %v506, %v516
        %v528 = vsel %vm526, %v507, %v517
        %v529 = vsel %vm526, %v508, %v518
        %v530 = vsel %vm526, %v509, %v519
        %v531 = vsel %vm526, %v510, %v520
        %v532 = vsel %vm526, %v511, %v521
        %v533 = vsel %vm526, %v512, %v522
        %v534 = vsel %vm526, %v513, %v523
        %v535 = vsel %vm526, %v514, %v524
        %v536 = vsel %vm526, %v515, %v525
        %v537 = vsel %vm526, %v516, %v506
        %v538 = vsel %vm526, %v517, %v507
        %v539 = vsel %vm526, %v518, %v508
        %v540 = vsel %vm526, %v519, %v509
        %v541 = vsel %vm526, %v520, %v510
        %v542 = vsel %vm526, %v521, %v511
        %v543 = vsel %vm526, %v522, %v512
        %v544 = vsel %vm526, %v523, %v513
        %v545 = vsel %vm526, %v524, %v514
        %v546 = vsel %vm526, %v525, %v515
        %v547 = vsel %vm504, %v430, %v527
        %v548 = vsel %vm505, %v431, %v537
        %v549 = vsel %vm504, %v405, %v528
        %v550 = vsel %vm505, %v406, %v538
        %v551 = vsel %vm504, %v407, %v529
        %v552 = vsel %vm505, %v408, %v539
        %v553 = vsel %vm504, %v409, %v530
        %v554 = vsel %vm505, %v410, %v540
        %v555 = vsel %vm504, %v411, %v531
        %v556 = vsel %vm505, %v412, %v541
        %v557 = vsel %vm504, %v413, %v532
        %v558 = vsel %vm505, %v414, %v542
        %v559 = vsel %vm504, %v415, %v533
        %v560 = vsel %vm505, %v416, %v543
        %v561 = vsel %vm504, %v417, %v534
        %v562 = vsel %vm505, %v418, %v544
        %v563 = vsel %vm504, %v419, %v535
        %v564 = vsel %vm505, %v420, %v545
        %v565 = vsel %vm504, %v436, %v536
        %v566 = vsel %vm505, %v437, %v546
        %583 = vrot.lane.b32.xlu0 %v430, 4
        %v584 = vpop.permute.xlu0 %583
        %585 = vrot.lane.b32.xlu0 %v431, 4
        %v586 = vpop.permute.xlu0 %585
        %587 = vrot.lane.b32.xlu0 %v405, 4
        %v588 = vpop.permute.xlu0 %587
        %589 = vrot.lane.b32.xlu0 %v406, 4
        %v590 = vpop.permute.xlu0 %589
        %591 = vrot.lane.b32.xlu0 %v407, 4
        %v592 = vpop.permute.xlu0 %591
        %593 = vrot.lane.b32.xlu0 %v408, 4
        %v594 = vpop.permute.xlu0 %593
        %595 = vrot.lane.b32.xlu0 %v409, 4
        %v596 = vpop.permute.xlu0 %595
        %597 = vrot.lane.b32.xlu0 %v410, 4
        %v598 = vpop.permute.xlu0 %597
        %599 = vrot.lane.b32.xlu0 %v411, 4
        %v600 = vpop.permute.xlu0 %599
        %601 = vrot.lane.b32.xlu0 %v412, 4
        %v602 = vpop.permute.xlu0 %601
        %603 = vrot.lane.b32.xlu0 %v413, 4
        %v604 = vpop.permute.xlu0 %603
        %605 = vrot.lane.b32.xlu0 %v414, 4
        %v606 = vpop.permute.xlu0 %605
        %607 = vrot.lane.b32.xlu0 %v415, 4
        %v608 = vpop.permute.xlu0 %607
        %609 = vrot.lane.b32.xlu0 %v416, 4
        %v610 = vpop.permute.xlu0 %609
        %611 = vrot.lane.b32.xlu0 %v417, 4
        %v612 = vpop.permute.xlu0 %611
        %613 = vrot.lane.b32.xlu0 %v418, 4
        %v614 = vpop.permute.xlu0 %613
        %647 = vrot.lane.b32.xlu0 %v547, 8
        %v648 = vpop.permute.xlu0 %647
        %649 = vrot.lane.b32.xlu0 %v548, 8
        %v650 = vpop.permute.xlu0 %649
        %651 = vrot.lane.b32.xlu0 %v549, 8
        %v652 = vpop.permute.xlu0 %651
        %653 = vrot.lane.b32.xlu0 %v550, 8
        %v654 = vpop.permute.xlu0 %653
        %655 = vrot.lane.b32.xlu0 %v551, 8
        %v656 = vpop.permute.xlu0 %655
        %657 = vrot.lane.b32.xlu0 %v552, 8
        %v658 = vpop.permute.xlu0 %657
        %659 = vrot.lane.b32.xlu0 %v553, 8
        %v660 = vpop.permute.xlu0 %659
        %661 = vrot.lane.b32.xlu0 %v554, 8
        %v662 = vpop.permute.xlu0 %661
        %663 = vrot.lane.b32.xlu0 %v555, 8
        %v664 = vpop.permute.xlu0 %663
        %665 = vrot.lane.b32.xlu0 %v556, 8
        %v666 = vpop.permute.xlu0 %665
        %667 = vrot.lane.b32.xlu0 %v557, 8
        %v668 = vpop.permute.xlu0 %667
        %669 = vrot.lane.b32.xlu0 %v558, 8
        %v670 = vpop.permute.xlu0 %669
        %671 = vrot.lane.b32.xlu0 %v559, 8
        %v672 = vpop.permute.xlu0 %671
        %673 = vrot.lane.b32.xlu0 %v560, 8
        %v674 = vpop.permute.xlu0 %673
        %675 = vrot.lane.b32.xlu0 %v561, 8
        %v676 = vpop.permute.xlu0 %675
        %677 = vrot.lane.b32.xlu0 %v562, 8
        %v678 = vpop.permute.xlu0 %677
        %711 = vrot.lane.b32.xlu0 %v486, 12
        %v712 = vpop.permute.xlu0 %711
        %713 = vrot.lane.b32.xlu0 %v487, 12
        %v714 = vpop.permute.xlu0 %713
        %715 = vrot.lane.b32.xlu0 %v488, 12
        %v716 = vpop.permute.xlu0 %715
        %717 = vrot.lane.b32.xlu0 %v489, 12
        %v718 = vpop.permute.xlu0 %717
        %719 = vrot.lane.b32.xlu0 %v490, 12
        %v720 = vpop.permute.xlu0 %719
        %721 = vrot.lane.b32.xlu0 %v491, 12
        %v722 = vpop.permute.xlu0 %721
        %723 = vrot.lane.b32.xlu0 %v492, 12
        %v724 = vpop.permute.xlu0 %723
        %725 = vrot.lane.b32.xlu0 %v493, 12
        %v726 = vpop.permute.xlu0 %725
        %727 = vrot.lane.b32.xlu0 %v494, 12
        %v728 = vpop.permute.xlu0 %727
        %729 = vrot.lane.b32.xlu0 %v495, 12
        %v730 = vpop.permute.xlu0 %729
        %731 = vrot.lane.b32.xlu0 %v496, 12
        %v732 = vpop.permute.xlu0 %731
        %733 = vrot.lane.b32.xlu0 %v497, 12
        %v734 = vpop.permute.xlu0 %733
        %735 = vrot.lane.b32.xlu0 %v498, 12
        %v736 = vpop.permute.xlu0 %735
        %737 = vrot.lane.b32.xlu0 %v499, 12
        %v738 = vpop.permute.xlu0 %737
        %739 = vrot.lane.b32.xlu0 %v500, 12
        %v740 = vpop.permute.xlu0 %739
        %741 = vrot.lane.b32.xlu0 %v501, 12
        %v742 = vpop.permute.xlu0 %741
        %761 = vrot.lane.b32.xlu0 %v405, 16
        %v762 = vpop.permute.xlu0 %761
        %763 = vrot.lane.b32.xlu0 %v406, 16
        %v764 = vpop.permute.xlu0 %763
        %765 = vrot.lane.b32.xlu0 %v407, 16
        %v766 = vpop.permute.xlu0 %765
        %767 = vrot.lane.b32.xlu0 %v408, 16
        %v768 = vpop.permute.xlu0 %767
        %769 = vrot.lane.b32.xlu0 %v409, 16
        %v770 = vpop.permute.xlu0 %769
        %771 = vrot.lane.b32.xlu0 %v410, 16
        %v772 = vpop.permute.xlu0 %771
        %773 = vrot.lane.b32.xlu0 %v411, 16
        %v774 = vpop.permute.xlu0 %773
        %775 = vrot.lane.b32.xlu0 %v412, 16
        %v776 = vpop.permute.xlu0 %775
        %777 = vrot.lane.b32.xlu0 %v413, 16
        %v778 = vpop.permute.xlu0 %777
        %779 = vrot.lane.b32.xlu0 %v414, 16
        %v780 = vpop.permute.xlu0 %779
        %781 = vrot.lane.b32.xlu0 %v415, 16
        %v782 = vpop.permute.xlu0 %781
        %783 = vrot.lane.b32.xlu0 %v416, 16
        %v784 = vpop.permute.xlu0 %783
        %785 = vrot.lane.b32.xlu0 %v417, 16
        %v786 = vpop.permute.xlu0 %785
        %787 = vrot.lane.b32.xlu0 %v418, 16
        %v788 = vpop.permute.xlu0 %787
        %789 = vrot.lane.b32.xlu0 %v419, 16
        %v790 = vpop.permute.xlu0 %789
        %791 = vrot.lane.b32.xlu0 %v420, 16
        %v792 = vpop.permute.xlu0 %791
        %811 = vrot.lane.b32.xlu0 %v549, 20
        %v812 = vpop.permute.xlu0 %811
        %813 = vrot.lane.b32.xlu0 %v550, 20
        %v814 = vpop.permute.xlu0 %813
        %815 = vrot.lane.b32.xlu0 %v551, 20
        %v816 = vpop.permute.xlu0 %815
        %817 = vrot.lane.b32.xlu0 %v552, 20
        %v818 = vpop.permute.xlu0 %817
        %819 = vrot.lane.b32.xlu0 %v553, 20
        %v820 = vpop.permute.xlu0 %819
        %821 = vrot.lane.b32.xlu0 %v554, 20
        %v822 = vpop.permute.xlu0 %821
        %823 = vrot.lane.b32.xlu0 %v555, 20
        %v824 = vpop.permute.xlu0 %823
        %825 = vrot.lane.b32.xlu0 %v556, 20
        %v826 = vpop.permute.xlu0 %825
        %827 = vrot.lane.b32.xlu0 %v557, 20
        %v828 = vpop.permute.xlu0 %827
        %829 = vrot.lane.b32.xlu0 %v558, 20
        %v830 = vpop.permute.xlu0 %829
        %831 = vrot.lane.b32.xlu0 %v559, 20
        %v832 = vpop.permute.xlu0 %831
        %833 = vrot.lane.b32.xlu0 %v560, 20
        %v834 = vpop.permute.xlu0 %833
        %835 = vrot.lane.b32.xlu0 %v561, 20
        %v836 = vpop.permute.xlu0 %835
        %837 = vrot.lane.b32.xlu0 %v562, 20
        %v838 = vpop.permute.xlu0 %837
        %839 = vrot.lane.b32.xlu0 %v563, 20
        %v840 = vpop.permute.xlu0 %839
        %841 = vrot.lane.b32.xlu0 %v564, 20
        %v842 = vpop.permute.xlu0 %841
        %861 = vrot.lane.b32.xlu0 %v488, 24
        %v862 = vpop.permute.xlu0 %861
        %863 = vrot.lane.b32.xlu0 %v489, 24
        %v864 = vpop.permute.xlu0 %863
        %865 = vrot.lane.b32.xlu0 %v490, 24
        %v866 = vpop.permute.xlu0 %865
        %867 = vrot.lane.b32.xlu0 %v491, 24
        %v868 = vpop.permute.xlu0 %867
        %869 = vrot.lane.b32.xlu0 %v492, 24
        %v870 = vpop.permute.xlu0 %869
        %871 = vrot.lane.b32.xlu0 %v493, 24
        %v872 = vpop.permute.xlu0 %871
        %873 = vrot.lane.b32.xlu0 %v494, 24
        %v874 = vpop.permute.xlu0 %873
        %875 = vrot.lane.b32.xlu0 %v495, 24
        %v876 = vpop.permute.xlu0 %875
        %877 = vrot.lane.b32.xlu0 %v496, 24
        %v878 = vpop.permute.xlu0 %877
        %879 = vrot.lane.b32.xlu0 %v497, 24
        %v880 = vpop.permute.xlu0 %879
        %881 = vrot.lane.b32.xlu0 %v498, 24
        %v882 = vpop.permute.xlu0 %881
        %883 = vrot.lane.b32.xlu0 %v499, 24
        %v884 = vpop.permute.xlu0 %883
        %885 = vrot.lane.b32.xlu0 %v500, 24
        %v886 = vpop.permute.xlu0 %885
        %887 = vrot.lane.b32.xlu0 %v501, 24
        %v888 = vpop.permute.xlu0 %887
        %889 = vrot.lane.b32.xlu0 %v502, 24
        %v890 = vpop.permute.xlu0 %889
        %891 = vrot.lane.b32.xlu0 %v503, 24
        %v892 = vpop.permute.xlu0 %891
        %911 = vrot.lane.b32.xlu0 %v407, 28
        %v912 = vpop.permute.xlu0 %911
        %913 = vrot.lane.b32.xlu0 %v408, 28
        %v914 = vpop.permute.xlu0 %913
        %915 = vrot.lane.b32.xlu0 %v409, 28
        %v916 = vpop.permute.xlu0 %915
        %917 = vrot.lane.b32.xlu0 %v410, 28
        %v918 = vpop.permute.xlu0 %917
        %919 = vrot.lane.b32.xlu0 %v411, 28
        %v920 = vpop.permute.xlu0 %919
        %921 = vrot.lane.b32.xlu0 %v412, 28
        %v922 = vpop.permute.xlu0 %921
        %923 = vrot.lane.b32.xlu0 %v413, 28
        %v924 = vpop.permute.xlu0 %923
        %925 = vrot.lane.b32.xlu0 %v414, 28
        %v926 = vpop.permute.xlu0 %925
        %927 = vrot.lane.b32.xlu0 %v415, 28
        %v928 = vpop.permute.xlu0 %927
        %929 = vrot.lane.b32.xlu0 %v416, 28
        %v930 = vpop.permute.xlu0 %929
        %931 = vrot.lane.b32.xlu0 %v417, 28
        %v932 = vpop.permute.xlu0 %931
        %933 = vrot.lane.b32.xlu0 %v418, 28
        %v934 = vpop.permute.xlu0 %933
        %935 = vrot.lane.b32.xlu0 %v419, 28
        %v936 = vpop.permute.xlu0 %935
        %937 = vrot.lane.b32.xlu0 %v420, 28
        %v938 = vpop.permute.xlu0 %937
        %939 = vrot.lane.b32.xlu0 %v436, 28
        %v940 = vpop.permute.xlu0 %939
        %941 = vrot.lane.b32.xlu0 %v437, 28
        %v942 = vpop.permute.xlu0 %941
        %961 = vrot.lane.b32.xlu0 %v551, 32
        %v962 = vpop.permute.xlu0 %961
        %963 = vrot.lane.b32.xlu0 %v552, 32
        %v964 = vpop.permute.xlu0 %963
        %965 = vrot.lane.b32.xlu0 %v553, 32
        %v966 = vpop.permute.xlu0 %965
        %967 = vrot.lane.b32.xlu0 %v554, 32
        %v968 = vpop.permute.xlu0 %967
        %969 = vrot.lane.b32.xlu0 %v555, 32
        %v970 = vpop.permute.xlu0 %969
        %971 = vrot.lane.b32.xlu0 %v556, 32
        %v972 = vpop.permute.xlu0 %971
        %973 = vrot.lane.b32.xlu0 %v557, 32
        %v974 = vpop.permute.xlu0 %973
        %975 = vrot.lane.b32.xlu0 %v558, 32
        %v976 = vpop.permute.xlu0 %975
        %977 = vrot.lane.b32.xlu0 %v559, 32
        %v978 = vpop.permute.xlu0 %977
        %979 = vrot.lane.b32.xlu0 %v560, 32
        %v980 = vpop.permute.xlu0 %979
        %981 = vrot.lane.b32.xlu0 %v561, 32
        %v982 = vpop.permute.xlu0 %981
        %983 = vrot.lane.b32.xlu0 %v562, 32
        %v984 = vpop.permute.xlu0 %983
        %985 = vrot.lane.b32.xlu0 %v563, 32
        %v986 = vpop.permute.xlu0 %985
        %987 = vrot.lane.b32.xlu0 %v564, 32
        %v988 = vpop.permute.xlu0 %987
        %989 = vrot.lane.b32.xlu0 %v565, 32
        %v990 = vpop.permute.xlu0 %989
        %991 = vrot.lane.b32.xlu0 %v566, 32
        %v992 = vpop.permute.xlu0 %991
        %vm1009 = vcmask 31744
        %v1010 = vsel %vm1009, %v484, %v584
        %v1011 = vsel %vm1009, %v485, %v586
        %v1012 = vsel %vm1009, %v486, %v588
        %v1013 = vsel %vm1009, %v487, %v590
        %v1014 = vsel %vm1009, %v488, %v592
        %v1015 = vsel %vm1009, %v489, %v594
        %v1016 = vsel %vm1009, %v490, %v596
        %v1017 = vsel %vm1009, %v491, %v598
        %v1018 = vsel %vm1009, %v492, %v600
        %v1019 = vsel %vm1009, %v493, %v602
        %v1020 = vsel %vm1009, %v494, %v604
        %v1021 = vsel %vm1009, %v495, %v606
        %v1022 = vsel %vm1009, %v496, %v608
        %v1023 = vsel %vm1009, %v497, %v610
        %v1024 = vsel %vm1009, %v498, %v612
        %v1025 = vsel %vm1009, %v499, %v614
        %vm1026 = vcmask 64512
        %v1027 = vsel %vm1026, %v1010, %v648
        %v1028 = vsel %vm1026, %v1011, %v650
        %v1029 = vsel %vm1026, %v1012, %v652
        %v1030 = vsel %vm1026, %v1013, %v654
        %v1031 = vsel %vm1026, %v1014, %v656
        %v1032 = vsel %vm1026, %v1015, %v658
        %v1033 = vsel %vm1026, %v1016, %v660
        %v1034 = vsel %vm1026, %v1017, %v662
        %v1035 = vsel %vm1026, %v1018, %v664
        %v1036 = vsel %vm1026, %v1019, %v666
        %v1037 = vsel %vm1026, %v1020, %v668
        %v1038 = vsel %vm1026, %v1021, %v670
        %v1039 = vsel %vm1026, %v1022, %v672
        %v1040 = vsel %vm1026, %v1023, %v674
        %v1041 = vsel %vm1026, %v1024, %v676
        %v1042 = vsel %vm1026, %v1025, %v678
        %vm1043 = vcmask 97280
        %v1044 = vsel %vm1043, %v1027, %v712
        %v1045 = vsel %vm1043, %v1028, %v714
        %v1046 = vsel %vm1043, %v1029, %v716
        %v1047 = vsel %vm1043, %v1030, %v718
        %v1048 = vsel %vm1043, %v1031, %v720
        %v1049 = vsel %vm1043, %v1032, %v722
        %v1050 = vsel %vm1043, %v1033, %v724
        %v1051 = vsel %vm1043, %v1034, %v726
        %v1052 = vsel %vm1043, %v1035, %v728
        %v1053 = vsel %vm1043, %v1036, %v730
        %v1054 = vsel %vm1043, %v1037, %v732
        %v1055 = vsel %vm1043, %v1038, %v734
        %v1056 = vsel %vm1043, %v1039, %v736
        %v1057 = vsel %vm1043, %v1040, %v738
        %v1058 = vsel %vm1043, %v1041, %v740
        %v1059 = vsel %vm1043, %v1042, %v742
        %vm1060 = vcmask 130048
        %v1061 = vsel %vm1060, %v1044, %v762
        %v1062 = vsel %vm1060, %v1045, %v764
        %v1063 = vsel %vm1060, %v1046, %v766
        %v1064 = vsel %vm1060, %v1047, %v768
        %v1065 = vsel %vm1060, %v1048, %v770
        %v1066 = vsel %vm1060, %v1049, %v772
        %v1067 = vsel %vm1060, %v1050, %v774
        %v1068 = vsel %vm1060, %v1051, %v776
        %v1069 = vsel %vm1060, %v1052, %v778
        %v1070 = vsel %vm1060, %v1053, %v780
        %v1071 = vsel %vm1060, %v1054, %v782
        %v1072 = vsel %vm1060, %v1055, %v784
        %v1073 = vsel %vm1060, %v1056, %v786
        %v1074 = vsel %vm1060, %v1057, %v788
        %v1075 = vsel %vm1060, %v1058, %v790
        %v1076 = vsel %vm1060, %v1059, %v792
        %vm1077 = vcmask 162816
        %v1078 = vsel %vm1077, %v1061, %v812
        %v1079 = vsel %vm1077, %v1062, %v814
        %v1080 = vsel %vm1077, %v1063, %v816
        %v1081 = vsel %vm1077, %v1064, %v818
        %v1082 = vsel %vm1077, %v1065, %v820
        %v1083 = vsel %vm1077, %v1066, %v822
        %v1084 = vsel %vm1077, %v1067, %v824
        %v1085 = vsel %vm1077, %v1068, %v826
        %v1086 = vsel %vm1077, %v1069, %v828
        %v1087 = vsel %vm1077, %v1070, %v830
        %v1088 = vsel %vm1077, %v1071, %v832
        %v1089 = vsel %vm1077, %v1072, %v834
        %v1090 = vsel %vm1077, %v1073, %v836
        %v1091 = vsel %vm1077, %v1074, %v838
        %v1092 = vsel %vm1077, %v1075, %v840
        %v1093 = vsel %vm1077, %v1076, %v842
        %vm1094 = vcmask 195584
        %v1095 = vsel %vm1094, %v1078, %v862
        %v1096 = vsel %vm1094, %v1079, %v864
        %v1097 = vsel %vm1094, %v1080, %v866
        %v1098 = vsel %vm1094, %v1081, %v868
        %v1099 = vsel %vm1094, %v1082, %v870
        %v1100 = vsel %vm1094, %v1083, %v872
        %v1101 = vsel %vm1094, %v1084, %v874
        %v1102 = vsel %vm1094, %v1085, %v876
        %v1103 = vsel %vm1094, %v1086, %v878
        %v1104 = vsel %vm1094, %v1087, %v880
        %v1105 = vsel %vm1094, %v1088, %v882
        %v1106 = vsel %vm1094, %v1089, %v884
        %v1107 = vsel %vm1094, %v1090, %v886
        %v1108 = vsel %vm1094, %v1091, %v888
        %v1109 = vsel %vm1094, %v1092, %v890
        %v1110 = vsel %vm1094, %v1093, %v892
        %vm1111 = vcmask 228352
        %v1112 = vsel %vm1111, %v1095, %v912
        %v1113 = vsel %vm1111, %v1096, %v914
        %v1114 = vsel %vm1111, %v1097, %v916
        %v1115 = vsel %vm1111, %v1098, %v918
        %v1116 = vsel %vm1111, %v1099, %v920
        %v1117 = vsel %vm1111, %v1100, %v922
        %v1118 = vsel %vm1111, %v1101, %v924
        %v1119 = vsel %vm1111, %v1102, %v926
        %v1120 = vsel %vm1111, %v1103, %v928
        %v1121 = vsel %vm1111, %v1104, %v930
        %v1122 = vsel %vm1111, %v1105, %v932
        %v1123 = vsel %vm1111, %v1106, %v934
        %v1124 = vsel %vm1111, %v1107, %v936
        %v1125 = vsel %vm1111, %v1108, %v938
        %v1126 = vsel %vm1111, %v1109, %v940
        %v1127 = vsel %vm1111, %v1110, %v942
        %vm1128 = vcmask 261120
        %v1129 = vsel %vm1128, %v1112, %v962
        %v1130 = vsel %vm1128, %v1113, %v964
        %v1131 = vsel %vm1128, %v1114, %v966
        %v1132 = vsel %vm1128, %v1115, %v968
        %v1133 = vsel %vm1128, %v1116, %v970
        %v1134 = vsel %vm1128, %v1117, %v972
        %v1135 = vsel %vm1128, %v1118, %v974
        %v1136 = vsel %vm1128, %v1119, %v976
        %v1137 = vsel %vm1128, %v1120, %v978
        %v1138 = vsel %vm1128, %v1121, %v980
        %v1139 = vsel %vm1128, %v1122, %v982
        %v1140 = vsel %vm1128, %v1123, %v984
        %v1141 = vsel %vm1128, %v1124, %v986
        %v1142 = vsel %vm1128, %v1125, %v988
        %v1143 = vsel %vm1128, %v1126, %v990
        %v1144 = vsel %vm1128, %v1127, %v992
        %v1145 = vld [vmem:[%s3] sm:$0xff]
        %v1146 = vld [vmem:[%s3 + $0x8] sm:$0xff]
        %v1147 = vld [vmem:[%s3 + $0x10] sm:$0xff]
        %v1148 = vld [vmem:[%s3 + $0x18] sm:$0xff]
        %v1149 = vld [vmem:[%s3 + $0x20] sm:$0xf]
        %v1150 = vld [vmem:[%s4] sm:$0x1]
        %v1152 = vlaneseq
        %v1153 = vshrl.u32 %v1152, 7
        %v1154 = vsub.s32 0, %v1153
        %v1155 = vrot.slane %v1150, %v1154
        %vm1157 = vcmask 293888
        %v1159 = vsel %vm1157, %v1129, 0
        %v1162 = vsel %vm1157, %v1130, 0
        %v1165 = vsel %vm1157, %v1131, 0
        %v1168 = vsel %vm1157, %v1132, 0
        %v1171 = vsel %vm1157, %v1133, 0
        %v1174 = vsel %vm1157, %v1134, 0
        %v1177 = vsel %vm1157, %v1135, 0
        %v1180 = vsel %vm1157, %v1136, 0
        %v1183 = vsel %vm1157, %v1137, 0
        %v1186 = vsel %vm1157, %v1138, 0
        %v1189 = vsel %vm1157, %v1139, 0
        %v1192 = vsel %vm1157, %v1140, 0
        %v1195 = vsel %vm1157, %v1141, 0
        %v1198 = vsel %vm1157, %v1142, 0
        %v1201 = vsel %vm1157, %v1143, 0
        %v1204 = vsel %vm1157, %v1144, 0
        %vm1206 = vcmask 1043456
        %v1208 = vsel %vm1206, %v1149, 0
        %1210 = vmatprep.subr.mxu0 0.0
        %1211 = vmatpush1.msra.mxu0 0.0
        %1212 = vmatprep.subr.mxu0 0.0
        %1213 = vmatpush1.msra.mxu0 0.0
        %1214 = vmatprep.subr.mxu0 0.0
        %1215 = vmatpush1.msra.mxu0 0.0
        %1216 = vmatprep.subr.mxu0 0.0
        %1217 = vmatpush1.msra.mxu0 0.0
        %1218 = vmatprep.subr.mxu0 0.0
        %1219 = vmatpush1.msra.mxu0 0.0
        %1220 = vmatprep.subr.mxu0 0.0
        %1221 = vmatpush1.msra.mxu0 0.0
        %1222 = vmatprep.subr.mxu0 0.0
        %1223 = vmatpush1.msra.mxu0 0.0
        %1224 = vmatprep.subr.mxu0 0.0
        %1225 = vmatpush1.msra.mxu0 0.0
        %1226 = vmatprep.subr.mxu0 0.0
        %1227 = vmatpush1.msra.mxu0 0.0
        %1228 = vmatprep.subr.mxu0 0.0
        %1229 = vmatpush1.msra.mxu0 0.0
        %1230 = vmatprep.subr.mxu0 0.0
        %1231 = vmatpush1.msra.mxu0 0.0
        %1232 = vmatprep.subr.mxu0 0.0
        %v1233 = vand.u32 %v1208, 4294901760
        %1234 = vmatpush1.msra.mxu0 %v1233
        %1235 = vmatprep.subr.mxu0 0.0
        %v1236 = vand.u32 %v1148, 4294901760
        %1237 = vmatpush1.msra.mxu0 %v1236
        %1238 = vmatprep.subr.mxu0 0.0
        %v1239 = vand.u32 %v1147, 4294901760
        %1240 = vmatpush1.msra.mxu0 %v1239
        %1241 = vmatprep.subr.mxu0 0.0
        %v1242 = vand.u32 %v1146, 4294901760
        %1243 = vmatpush1.msra.mxu0 %v1242
        %1244 = vmatprep.subr.mxu0 0.0
        %v1245 = vand.u32 %v1145, 4294901760
        %1246 = vmatpush1.msra.mxu0 %v1245
        %1247 = vmatprep.subr.mxu0 0.0
        %1248 = vmatpush2.msra.mxu0 0.0
        %1249 = vmatprep.subr.mxu0 0.0
        %1250 = vmatpush2.msra.mxu0 0.0
        %1251 = vmatprep.subr.mxu0 0.0
        %1252 = vmatpush2.msra.mxu0 0.0
        %1253 = vmatprep.subr.mxu0 0.0
        %1254 = vmatpush2.msra.mxu0 0.0
        %1255 = vmatprep.subr.mxu0 0.0
        %1256 = vmatpush2.msra.mxu0 0.0
        %1257 = vmatprep.subr.mxu0 0.0
        %1258 = vmatpush2.msra.mxu0 0.0
        %1259 = vmatprep.subr.mxu0 0.0
        %1260 = vmatpush2.msra.mxu0 0.0
        %1261 = vmatprep.subr.mxu0 0.0
        %1262 = vmatpush2.msra.mxu0 0.0
        %1263 = vmatprep.subr.mxu0 0.0
        %1264 = vmatpush2.msra.mxu0 0.0
        %1265 = vmatprep.subr.mxu0 0.0
        %1266 = vmatpush2.msra.mxu0 0.0
        %1267 = vmatprep.subr.mxu0 0.0
        %1268 = vmatpush2.msra.mxu0 0.0
        %1269 = vmatprep.subr.mxu0 0.0
        %1270 = vmatpush2.msra.mxu0 0.0
        %1271 = vmatprep.subr.mxu0 0.0
        %1272 = vmatpush2.msra.mxu0 0.0
        %1273 = vmatprep.subr.mxu0 0.0
        %1274 = vmatpush2.msra.mxu0 0.0
        %1275 = vmatprep.subr.mxu0 0.0
        %1276 = vmatpush2.msra.mxu0 0.0
        %1277 = vmatprep.subr.mxu0 0.0
        %1278 = vmatpush2.msra.mxu0 0.0
        %1279 = vmatprep.mubr.f32.mxu0 0.0
        %v1280 = vand.u32 %v1159, 4294901760
        %v1281 = vsub.f32 %v1159, %v1280
        %v1282 = vand.u32 %v1281, 4294901760
        %v1283 = vsub.f32 %v1281, %v1282
        %v1284 = vand.u32 %v1283, 4294901760
        %1285 = vmatmul.mubr.f32.gmra.mxu0 %v1284
        %v1286 = vpop.f32.mrf.mxu0
        %v1287 = vadd.f32 %v1155, %v1286
        %v1288 = vpop.f32.mrf.mxu0
        %1289 = vmatprep.mubr.f32.mxu0 0.0
        %v1290 = vand.u32 %v1162, 4294901760
        %v1291 = vsub.f32 %v1162, %v1290
        %v1292 = vand.u32 %v1291, 4294901760
        %v1293 = vsub.f32 %v1291, %v1292
        %v1294 = vand.u32 %v1293, 4294901760
        %1295 = vmatmul.mubr.f32.gmra.mxu0 %v1294
        %v1296 = vpop.f32.mrf.mxu0
        %v1297 = vadd.f32 %v1155, %v1296
        %v1298 = vpop.f32.mrf.mxu0
        %1299 = vmatprep.mubr.f32.mxu0 0.0
        %v1300 = vand.u32 %v1165, 4294901760
        %v1301 = vsub.f32 %v1165, %v1300
        %v1302 = vand.u32 %v1301, 4294901760
        %v1303 = vsub.f32 %v1301, %v1302
        %v1304 = vand.u32 %v1303, 4294901760
        %1305 = vmatmul.mubr.f32.gmra.mxu0 %v1304
        %v1306 = vpop.f32.mrf.mxu0
        %v1307 = vadd.f32 %v1155, %v1306
        %v1308 = vpop.f32.mrf.mxu0
        %1309 = vmatprep.mubr.f32.mxu0 0.0
        %v1310 = vand.u32 %v1168, 4294901760
        %v1311 = vsub.f32 %v1168, %v1310
        %v1312 = vand.u32 %v1311, 4294901760
        %v1313 = vsub.f32 %v1311, %v1312
        %v1314 = vand.u32 %v1313, 4294901760
        %1315 = vmatmul.mubr.f32.gmra.mxu0 %v1314
        %v1316 = vpop.f32.mrf.mxu0
        %v1317 = vadd.f32 %v1155, %v1316
        %v1318 = vpop.f32.mrf.mxu0
        %1319 = vmatprep.mubr.f32.mxu0 0.0
        %v1320 = vand.u32 %v1171, 4294901760
        %v1321 = vsub.f32 %v1171, %v1320
        %v1322 = vand.u32 %v1321, 4294901760
        %v1323 = vsub.f32 %v1321, %v1322
        %v1324 = vand.u32 %v1323, 4294901760
        %1325 = vmatmul.mubr.f32.gmra.mxu0 %v1324
        %v1326 = vpop.f32.mrf.mxu0
        %v1327 = vadd.f32 %v1155, %v1326
        %v1328 = vpop.f32.mrf.mxu0
        %1329 = vmatprep.mubr.f32.mxu0 0.0
        %v1330 = vand.u32 %v1174, 4294901760
        %v1331 = vsub.f32 %v1174, %v1330
        %v1332 = vand.u32 %v1331, 4294901760
        %v1333 = vsub.f32 %v1331, %v1332
        %v1334 = vand.u32 %v1333, 4294901760
        %1335 = vmatmul.mubr.f32.gmra.mxu0 %v1334
        %v1336 = vpop.f32.mrf.mxu0
        %v1337 = vadd.f32 %v1155, %v1336
        %v1338 = vpop.f32.mrf.mxu0
        %1339 = vmatprep.mubr.f32.mxu0 0.0
        %v1340 = vand.u32 %v1177, 4294901760
        %v1341 = vsub.f32 %v1177, %v1340
        %v1342 = vand.u32 %v1341, 4294901760
        %v1343 = vsub.f32 %v1341, %v1342
        %v1344 = vand.u32 %v1343, 4294901760
        %1345 = vmatmul.mubr.f32.gmra.mxu0 %v1344
        %v1346 = vpop.f32.mrf.mxu0
        %v1347 = vadd.f32 %v1155, %v1346
        %v1348 = vpop.f32.mrf.mxu0
        %1349 = vmatprep.mubr.f32.mxu0 0.0
        %v1350 = vand.u32 %v1180, 4294901760
        %v1351 = vsub.f32 %v1180, %v1350
        %v1352 = vand.u32 %v1351, 4294901760
        %v1353 = vsub.f32 %v1351, %v1352
        %v1354 = vand.u32 %v1353, 4294901760
        %1355 = vmatmul.mubr.f32.gmra.mxu0 %v1354
        %v1356 = vpop.f32.mrf.mxu0
        %v1357 = vadd.f32 %v1155, %v1356
        %v1358 = vpop.f32.mrf.mxu0
        %1359 = vmatprep.mubr.f32.mxu0 0.0
        %v1360 = vand.u32 %v1183, 4294901760
        %v1361 = vsub.f32 %v1183, %v1360
        %v1362 = vand.u32 %v1361, 4294901760
        %v1363 = vsub.f32 %v1361, %v1362
        %v1364 = vand.u32 %v1363, 4294901760
        %1365 = vmatmul.mubr.f32.gmra.mxu0 %v1364
        %v1366 = vpop.f32.mrf.mxu0
        %v1367 = vadd.f32 %v1155, %v1366
        %v1368 = vpop.f32.mrf.mxu0
        %1369 = vmatprep.mubr.f32.mxu0 0.0
        %v1370 = vand.u32 %v1186, 4294901760
        %v1371 = vsub.f32 %v1186, %v1370
        %v1372 = vand.u32 %v1371, 4294901760
        %v1373 = vsub.f32 %v1371, %v1372
        %v1374 = vand.u32 %v1373, 4294901760
        %1375 = vmatmul.mubr.f32.gmra.mxu0 %v1374
        %v1376 = vpop.f32.mrf.mxu0
        %v1377 = vadd.f32 %v1155, %v1376
        %v1378 = vpop.f32.mrf.mxu0
        %1379 = vmatprep.mubr.f32.mxu0 0.0
        %v1380 = vand.u32 %v1189, 4294901760
        %v1381 = vsub.f32 %v1189, %v1380
        %v1382 = vand.u32 %v1381, 4294901760
        %v1383 = vsub.f32 %v1381, %v1382
        %v1384 = vand.u32 %v1383, 4294901760
        %1385 = vmatmul.mubr.f32.gmra.mxu0 %v1384
        %v1386 = vpop.f32.mrf.mxu0
        %v1387 = vadd.f32 %v1155, %v1386
        %v1388 = vpop.f32.mrf.mxu0
        %1389 = vmatprep.mubr.f32.mxu0 0.0
        %v1390 = vand.u32 %v1192, 4294901760
        %v1391 = vsub.f32 %v1192, %v1390
        %v1392 = vand.u32 %v1391, 4294901760
        %v1393 = vsub.f32 %v1391, %v1392
        %v1394 = vand.u32 %v1393, 4294901760
        %1395 = vmatmul.mubr.f32.gmra.mxu0 %v1394
        %v1396 = vpop.f32.mrf.mxu0
        %v1397 = vadd.f32 %v1155, %v1396
        %v1398 = vpop.f32.mrf.mxu0
        %1399 = vmatprep.mubr.f32.mxu0 0.0
        %v1400 = vand.u32 %v1195, 4294901760
        %v1401 = vsub.f32 %v1195, %v1400
        %v1402 = vand.u32 %v1401, 4294901760
        %v1403 = vsub.f32 %v1401, %v1402
        %v1404 = vand.u32 %v1403, 4294901760
        %1405 = vmatmul.mubr.f32.gmra.mxu0 %v1404
        %v1406 = vpop.f32.mrf.mxu0
        %v1407 = vadd.f32 %v1155, %v1406
        %v1408 = vpop.f32.mrf.mxu0
        %1409 = vmatprep.mubr.f32.mxu0 0.0
        %v1410 = vand.u32 %v1198, 4294901760
        %v1411 = vsub.f32 %v1198, %v1410
        %v1412 = vand.u32 %v1411, 4294901760
        %v1413 = vsub.f32 %v1411, %v1412
        %v1414 = vand.u32 %v1413, 4294901760
        %1415 = vmatmul.mubr.f32.gmra.mxu0 %v1414
        %v1416 = vpop.f32.mrf.mxu0
        %v1417 = vadd.f32 %v1155, %v1416
        %v1418 = vpop.f32.mrf.mxu0
        %1419 = vmatprep.mubr.f32.mxu0 0.0
        %v1420 = vand.u32 %v1201, 4294901760
        %v1421 = vsub.f32 %v1201, %v1420
        %v1422 = vand.u32 %v1421, 4294901760
        %v1423 = vsub.f32 %v1421, %v1422
        %v1424 = vand.u32 %v1423, 4294901760
        %1425 = vmatmul.mubr.f32.gmra.mxu0 %v1424
        %v1426 = vpop.f32.mrf.mxu0
        %v1427 = vadd.f32 %v1155, %v1426
        %v1428 = vpop.f32.mrf.mxu0
        %1429 = vmatprep.mubr.f32.mxu0 0.0
        %v1430 = vand.u32 %v1204, 4294901760
        %v1431 = vsub.f32 %v1204, %v1430
        %v1432 = vand.u32 %v1431, 4294901760
        %v1433 = vsub.f32 %v1431, %v1432
        %v1434 = vand.u32 %v1433, 4294901760
        %1435 = vmatmul.mubr.f32.gmra.mxu0 %v1434
        %v1436 = vpop.f32.mrf.mxu0
        %v1437 = vadd.f32 %v1155, %v1436
        %v1438 = vpop.f32.mrf.mxu0
        %1439 = vdwg.mxu0
        %1440 = vmatprep.subr.mxu0 0.0
        %1441 = vmatpush1.msra.mxu0 0.0
        %1442 = vmatprep.subr.mxu0 0.0
        %1443 = vmatpush1.msra.mxu0 0.0
        %1444 = vmatprep.subr.mxu0 0.0
        %1445 = vmatpush1.msra.mxu0 0.0
        %1446 = vmatprep.subr.mxu0 0.0
        %1447 = vmatpush1.msra.mxu0 0.0
        %1448 = vmatprep.subr.mxu0 0.0
        %1449 = vmatpush1.msra.mxu0 0.0
        %1450 = vmatprep.subr.mxu0 0.0
        %1451 = vmatpush1.msra.mxu0 0.0
        %1452 = vmatprep.subr.mxu0 0.0
        %1453 = vmatpush1.msra.mxu0 0.0
        %1454 = vmatprep.subr.mxu0 0.0
        %1455 = vmatpush1.msra.mxu0 0.0
        %1456 = vmatprep.subr.mxu0 0.0
        %1457 = vmatpush1.msra.mxu0 0.0
        %1458 = vmatprep.subr.mxu0 0.0
        %1459 = vmatpush1.msra.mxu0 0.0
        %1460 = vmatprep.subr.mxu0 0.0
        %1461 = vmatpush1.msra.mxu0 0.0
        %1462 = vmatprep.subr.mxu0 0.0
        %v1463 = vand.u32 %v1208, 4294901760
        %v1464 = vsub.f32 %v1208, %v1463
        %v1465 = vand.u32 %v1464, 4294901760
        %v1466 = vsub.f32 %v1464, %v1465
        %v1467 = vand.u32 %v1466, 4294901760
        %1468 = vmatpush1.msra.mxu0 %v1467
        %1469 = vmatprep.subr.mxu0 0.0
        %v1470 = vand.u32 %v1148, 4294901760
        %v1471 = vsub.f32 %v1148, %v1470
        %v1472 = vand.u32 %v1471, 4294901760
        %v1473 = vsub.f32 %v1471, %v1472
        %v1474 = vand.u32 %v1473, 4294901760
        %1475 = vmatpush1.msra.mxu0 %v1474
        %1476 = vmatprep.subr.mxu0 0.0
        %v1477 = vand.u32 %v1147, 4294901760
        %v1478 = vsub.f32 %v1147, %v1477
        %v1479 = vand.u32 %v1478, 4294901760
        %v1480 = vsub.f32 %v1478, %v1479
        %v1481 = vand.u32 %v1480, 4294901760
        %1482 = vmatpush1.msra.mxu0 %v1481
        %1483 = vmatprep.subr.mxu0 0.0
        %v1484 = vand.u32 %v1146, 4294901760
        %v1485 = vsub.f32 %v1146, %v1484
        %v1486 = vand.u32 %v1485, 4294901760
        %v1487 = vsub.f32 %v1485, %v1486
        %v1488 = vand.u32 %v1487, 4294901760
        %1489 = vmatpush1.msra.mxu0 %v1488
        %1490 = vmatprep.subr.mxu0 0.0
        %v1491 = vand.u32 %v1145, 4294901760
        %v1492 = vsub.f32 %v1145, %v1491
        %v1493 = vand.u32 %v1492, 4294901760
        %v1494 = vsub.f32 %v1492, %v1493
        %v1495 = vand.u32 %v1494, 4294901760
        %1496 = vmatpush1.msra.mxu0 %v1495
        %1497 = vmatprep.subr.mxu0 0.0
        %1498 = vmatpush2.msra.mxu0 0.0
        %1499 = vmatprep.subr.mxu0 0.0
        %1500 = vmatpush2.msra.mxu0 0.0
        %1501 = vmatprep.subr.mxu0 0.0
        %1502 = vmatpush2.msra.mxu0 0.0
        %1503 = vmatprep.subr.mxu0 0.0
        %1504 = vmatpush2.msra.mxu0 0.0
        %1505 = vmatprep.subr.mxu0 0.0
        %1506 = vmatpush2.msra.mxu0 0.0
        %1507 = vmatprep.subr.mxu0 0.0
        %1508 = vmatpush2.msra.mxu0 0.0
        %1509 = vmatprep.subr.mxu0 0.0
        %1510 = vmatpush2.msra.mxu0 0.0
        %1511 = vmatprep.subr.mxu0 0.0
        %1512 = vmatpush2.msra.mxu0 0.0
        %1513 = vmatprep.subr.mxu0 0.0
        %1514 = vmatpush2.msra.mxu0 0.0
        %1515 = vmatprep.subr.mxu0 0.0
        %1516 = vmatpush2.msra.mxu0 0.0
        %1517 = vmatprep.subr.mxu0 0.0
        %1518 = vmatpush2.msra.mxu0 0.0
        %1519 = vmatprep.subr.mxu0 0.0
        %1520 = vmatpush2.msra.mxu0 0.0
        %1521 = vmatprep.subr.mxu0 0.0
        %1522 = vmatpush2.msra.mxu0 0.0
        %1523 = vmatprep.subr.mxu0 0.0
        %1524 = vmatpush2.msra.mxu0 0.0
        %1525 = vmatprep.subr.mxu0 0.0
        %1526 = vmatpush2.msra.mxu0 0.0
        %1527 = vmatprep.subr.mxu0 0.0
        %1528 = vmatpush2.msra.mxu0 0.0
        %1529 = vmatprep.mubr.f32.mxu0 0.0
        %v1530 = vand.u32 %v1159, 4294901760
        %1531 = vmatmul.mubr.f32.gmra.mxu0 %v1530
        %v1532 = vpop.f32.mrf.mxu0
        %v1533 = vadd.f32 %v1287, %v1532
        %v1534 = vpop.f32.mrf.mxu0
        %1535 = vmatprep.mubr.f32.mxu0 0.0
        %v1536 = vand.u32 %v1162, 4294901760
        %1537 = vmatmul.mubr.f32.gmra.mxu0 %v1536
        %v1538 = vpop.f32.mrf.mxu0
        %v1539 = vadd.f32 %v1297, %v1538
        %v1540 = vpop.f32.mrf.mxu0
        %1541 = vmatprep.mubr.f32.mxu0 0.0
        %v1542 = vand.u32 %v1165, 4294901760
        %1543 = vmatmul.mubr.f32.gmra.mxu0 %v1542
        %v1544 = vpop.f32.mrf.mxu0
        %v1545 = vadd.f32 %v1307, %v1544
        %v1546 = vpop.f32.mrf.mxu0
        %1547 = vmatprep.mubr.f32.mxu0 0.0
        %v1548 = vand.u32 %v1168, 4294901760
        %1549 = vmatmul.mubr.f32.gmra.mxu0 %v1548
        %v1550 = vpop.f32.mrf.mxu0
        %v1551 = vadd.f32 %v1317, %v1550
        %v1552 = vpop.f32.mrf.mxu0
        %1553 = vmatprep.mubr.f32.mxu0 0.0
        %v1554 = vand.u32 %v1171, 4294901760
        %1555 = vmatmul.mubr.f32.gmra.mxu0 %v1554
        %v1556 = vpop.f32.mrf.mxu0
        %v1557 = vadd.f32 %v1327, %v1556
        %v1558 = vpop.f32.mrf.mxu0
        %1559 = vmatprep.mubr.f32.mxu0 0.0
        %v1560 = vand.u32 %v1174, 4294901760
        %1561 = vmatmul.mubr.f32.gmra.mxu0 %v1560
        %v1562 = vpop.f32.mrf.mxu0
        %v1563 = vadd.f32 %v1337, %v1562
        %v1564 = vpop.f32.mrf.mxu0
        %1565 = vmatprep.mubr.f32.mxu0 0.0
        %v1566 = vand.u32 %v1177, 4294901760
        %1567 = vmatmul.mubr.f32.gmra.mxu0 %v1566
        %v1568 = vpop.f32.mrf.mxu0
        %v1569 = vadd.f32 %v1347, %v1568
        %v1570 = vpop.f32.mrf.mxu0
        %1571 = vmatprep.mubr.f32.mxu0 0.0
        %v1572 = vand.u32 %v1180, 4294901760
        %1573 = vmatmul.mubr.f32.gmra.mxu0 %v1572
        %v1574 = vpop.f32.mrf.mxu0
        %v1575 = vadd.f32 %v1357, %v1574
        %v1576 = vpop.f32.mrf.mxu0
        %1577 = vmatprep.mubr.f32.mxu0 0.0
        %v1578 = vand.u32 %v1183, 4294901760
        %1579 = vmatmul.mubr.f32.gmra.mxu0 %v1578
        %v1580 = vpop.f32.mrf.mxu0
        %v1581 = vadd.f32 %v1367, %v1580
        %v1582 = vpop.f32.mrf.mxu0
        %1583 = vmatprep.mubr.f32.mxu0 0.0
        %v1584 = vand.u32 %v1186, 4294901760
        %1585 = vmatmul.mubr.f32.gmra.mxu0 %v1584
        %v1586 = vpop.f32.mrf.mxu0
        %v1587 = vadd.f32 %v1377, %v1586
        %v1588 = vpop.f32.mrf.mxu0
        %1589 = vmatprep.mubr.f32.mxu0 0.0
        %v1590 = vand.u32 %v1189, 4294901760
        %1591 = vmatmul.mubr.f32.gmra.mxu0 %v1590
        %v1592 = vpop.f32.mrf.mxu0
        %v1593 = vadd.f32 %v1387, %v1592
        %v1594 = vpop.f32.mrf.mxu0
        %1595 = vmatprep.mubr.f32.mxu0 0.0
        %v1596 = vand.u32 %v1192, 4294901760
        %1597 = vmatmul.mubr.f32.gmra.mxu0 %v1596
        %v1598 = vpop.f32.mrf.mxu0
        %v1599 = vadd.f32 %v1397, %v1598
        %v1600 = vpop.f32.mrf.mxu0
        %1601 = vmatprep.mubr.f32.mxu0 0.0
        %v1602 = vand.u32 %v1195, 4294901760
        %1603 = vmatmul.mubr.f32.gmra.mxu0 %v1602
        %v1604 = vpop.f32.mrf.mxu0
        %v1605 = vadd.f32 %v1407, %v1604
        %v1606 = vpop.f32.mrf.mxu0
        %1607 = vmatprep.mubr.f32.mxu0 0.0
        %v1608 = vand.u32 %v1198, 4294901760
        %1609 = vmatmul.mubr.f32.gmra.mxu0 %v1608
        %v1610 = vpop.f32.mrf.mxu0
        %v1611 = vadd.f32 %v1417, %v1610
        %v1612 = vpop.f32.mrf.mxu0
        %1613 = vmatprep.mubr.f32.mxu0 0.0
        %v1614 = vand.u32 %v1201, 4294901760
        %1615 = vmatmul.mubr.f32.gmra.mxu0 %v1614
        %v1616 = vpop.f32.mrf.mxu0
        %v1617 = vadd.f32 %v1427, %v1616
        %v1618 = vpop.f32.mrf.mxu0
        %1619 = vmatprep.mubr.f32.mxu0 0.0
        %v1620 = vand.u32 %v1204, 4294901760
        %1621 = vmatmul.mubr.f32.gmra.mxu0 %v1620
        %v1622 = vpop.f32.mrf.mxu0
        %v1623 = vadd.f32 %v1437, %v1622
        %v1624 = vpop.f32.mrf.mxu0
        %1625 = vdwg.mxu0
        %1626 = vmatprep.subr.mxu0 0.0
        %1627 = vmatpush1.msra.mxu0 0.0
        %1628 = vmatprep.subr.mxu0 0.0
        %1629 = vmatpush1.msra.mxu0 0.0
        %1630 = vmatprep.subr.mxu0 0.0
        %1631 = vmatpush1.msra.mxu0 0.0
        %1632 = vmatprep.subr.mxu0 0.0
        %1633 = vmatpush1.msra.mxu0 0.0
        %1634 = vmatprep.subr.mxu0 0.0
        %1635 = vmatpush1.msra.mxu0 0.0
        %1636 = vmatprep.subr.mxu0 0.0
        %1637 = vmatpush1.msra.mxu0 0.0
        %1638 = vmatprep.subr.mxu0 0.0
        %1639 = vmatpush1.msra.mxu0 0.0
        %1640 = vmatprep.subr.mxu0 0.0
        %1641 = vmatpush1.msra.mxu0 0.0
        %1642 = vmatprep.subr.mxu0 0.0
        %1643 = vmatpush1.msra.mxu0 0.0
        %1644 = vmatprep.subr.mxu0 0.0
        %1645 = vmatpush1.msra.mxu0 0.0
        %1646 = vmatprep.subr.mxu0 0.0
        %1647 = vmatpush1.msra.mxu0 0.0
        %1648 = vmatprep.subr.mxu0 0.0
        %v1649 = vand.u32 %v1208, 4294901760
        %v1650 = vsub.f32 %v1208, %v1649
        %1651 = vmatpush1.msra.mxu0 %v1650
        %1652 = vmatprep.subr.mxu0 0.0
        %v1653 = vand.u32 %v1148, 4294901760
        %v1654 = vsub.f32 %v1148, %v1653
        %1655 = vmatpush1.msra.mxu0 %v1654
        %1656 = vmatprep.subr.mxu0 0.0
        %v1657 = vand.u32 %v1147, 4294901760
        %v1658 = vsub.f32 %v1147, %v1657
        %1659 = vmatpush1.msra.mxu0 %v1658
        %1660 = vmatprep.subr.mxu0 0.0
        %v1661 = vand.u32 %v1146, 4294901760
        %v1662 = vsub.f32 %v1146, %v1661
        %1663 = vmatpush1.msra.mxu0 %v1662
        %1664 = vmatprep.subr.mxu0 0.0
        %v1665 = vand.u32 %v1145, 4294901760
        %v1666 = vsub.f32 %v1145, %v1665
        %1667 = vmatpush1.msra.mxu0 %v1666
        %1668 = vmatprep.subr.mxu0 0.0
        %1669 = vmatpush2.msra.mxu0 0.0
        %1670 = vmatprep.subr.mxu0 0.0
        %1671 = vmatpush2.msra.mxu0 0.0
        %1672 = vmatprep.subr.mxu0 0.0
        %1673 = vmatpush2.msra.mxu0 0.0
        %1674 = vmatprep.subr.mxu0 0.0
        %1675 = vmatpush2.msra.mxu0 0.0
        %1676 = vmatprep.subr.mxu0 0.0
        %1677 = vmatpush2.msra.mxu0 0.0
        %1678 = vmatprep.subr.mxu0 0.0
        %1679 = vmatpush2.msra.mxu0 0.0
        %1680 = vmatprep.subr.mxu0 0.0
        %1681 = vmatpush2.msra.mxu0 0.0
        %1682 = vmatprep.subr.mxu0 0.0
        %1683 = vmatpush2.msra.mxu0 0.0
        %1684 = vmatprep.subr.mxu0 0.0
        %1685 = vmatpush2.msra.mxu0 0.0
        %1686 = vmatprep.subr.mxu0 0.0
        %1687 = vmatpush2.msra.mxu0 0.0
        %1688 = vmatprep.subr.mxu0 0.0
        %1689 = vmatpush2.msra.mxu0 0.0
        %1690 = vmatprep.subr.mxu0 0.0
        %1691 = vmatpush2.msra.mxu0 0.0
        %1692 = vmatprep.subr.mxu0 0.0
        %1693 = vmatpush2.msra.mxu0 0.0
        %1694 = vmatprep.subr.mxu0 0.0
        %1695 = vmatpush2.msra.mxu0 0.0
        %1696 = vmatprep.subr.mxu0 0.0
        %1697 = vmatpush2.msra.mxu0 0.0
        %1698 = vmatprep.subr.mxu0 0.0
        %1699 = vmatpush2.msra.mxu0 0.0
        %1700 = vmatprep.mubr.f32.mxu0 0.0
        %v1701 = vand.u32 %v1159, 4294901760
        %v1702 = vsub.f32 %v1159, %v1701
        %1703 = vmatmul.mubr.f32.gmra.mxu0 %v1702
        %v1704 = vpop.f32.mrf.mxu0
        %v1705 = vadd.f32 %v1533, %v1704
        %v1706 = vpop.f32.mrf.mxu0
        %1707 = vmatprep.mubr.f32.mxu0 0.0
        %v1708 = vand.u32 %v1162, 4294901760
        %v1709 = vsub.f32 %v1162, %v1708
        %1710 = vmatmul.mubr.f32.gmra.mxu0 %v1709
        %v1711 = vpop.f32.mrf.mxu0
        %v1712 = vadd.f32 %v1539, %v1711
        %v1713 = vpop.f32.mrf.mxu0
        %1714 = vmatprep.mubr.f32.mxu0 0.0
        %v1715 = vand.u32 %v1165, 4294901760
        %v1716 = vsub.f32 %v1165, %v1715
        %1717 = vmatmul.mubr.f32.gmra.mxu0 %v1716
        %v1718 = vpop.f32.mrf.mxu0
        %v1719 = vadd.f32 %v1545, %v1718
        %v1720 = vpop.f32.mrf.mxu0
        %1721 = vmatprep.mubr.f32.mxu0 0.0
        %v1722 = vand.u32 %v1168, 4294901760
        %v1723 = vsub.f32 %v1168, %v1722
        %1724 = vmatmul.mubr.f32.gmra.mxu0 %v1723
        %v1725 = vpop.f32.mrf.mxu0
        %v1726 = vadd.f32 %v1551, %v1725
        %v1727 = vpop.f32.mrf.mxu0
        %1728 = vmatprep.mubr.f32.mxu0 0.0
        %v1729 = vand.u32 %v1171, 4294901760
        %v1730 = vsub.f32 %v1171, %v1729
        %1731 = vmatmul.mubr.f32.gmra.mxu0 %v1730
        %v1732 = vpop.f32.mrf.mxu0
        %v1733 = vadd.f32 %v1557, %v1732
        %v1734 = vpop.f32.mrf.mxu0
        %1735 = vmatprep.mubr.f32.mxu0 0.0
        %v1736 = vand.u32 %v1174, 4294901760
        %v1737 = vsub.f32 %v1174, %v1736
        %1738 = vmatmul.mubr.f32.gmra.mxu0 %v1737
        %v1739 = vpop.f32.mrf.mxu0
        %v1740 = vadd.f32 %v1563, %v1739
        %v1741 = vpop.f32.mrf.mxu0
        %1742 = vmatprep.mubr.f32.mxu0 0.0
        %v1743 = vand.u32 %v1177, 4294901760
        %v1744 = vsub.f32 %v1177, %v1743
        %1745 = vmatmul.mubr.f32.gmra.mxu0 %v1744
        %v1746 = vpop.f32.mrf.mxu0
        %v1747 = vadd.f32 %v1569, %v1746
        %v1748 = vpop.f32.mrf.mxu0
        %1749 = vmatprep.mubr.f32.mxu0 0.0
        %v1750 = vand.u32 %v1180, 4294901760
        %v1751 = vsub.f32 %v1180, %v1750
        %1752 = vmatmul.mubr.f32.gmra.mxu0 %v1751
        %v1753 = vpop.f32.mrf.mxu0
        %v1754 = vadd.f32 %v1575, %v1753
        %v1755 = vpop.f32.mrf.mxu0
        %1756 = vmatprep.mubr.f32.mxu0 0.0
        %v1757 = vand.u32 %v1183, 4294901760
        %v1758 = vsub.f32 %v1183, %v1757
        %1759 = vmatmul.mubr.f32.gmra.mxu0 %v1758
        %v1760 = vpop.f32.mrf.mxu0
        %v1761 = vadd.f32 %v1581, %v1760
        %v1762 = vpop.f32.mrf.mxu0
        %1763 = vmatprep.mubr.f32.mxu0 0.0
        %v1764 = vand.u32 %v1186, 4294901760
        %v1765 = vsub.f32 %v1186, %v1764
        %1766 = vmatmul.mubr.f32.gmra.mxu0 %v1765
        %v1767 = vpop.f32.mrf.mxu0
        %v1768 = vadd.f32 %v1587, %v1767
        %v1769 = vpop.f32.mrf.mxu0
        %1770 = vmatprep.mubr.f32.mxu0 0.0
        %v1771 = vand.u32 %v1189, 4294901760
        %v1772 = vsub.f32 %v1189, %v1771
        %1773 = vmatmul.mubr.f32.gmra.mxu0 %v1772
        %v1774 = vpop.f32.mrf.mxu0
        %v1775 = vadd.f32 %v1593, %v1774
        %v1776 = vpop.f32.mrf.mxu0
        %1777 = vmatprep.mubr.f32.mxu0 0.0
        %v1778 = vand.u32 %v1192, 4294901760
        %v1779 = vsub.f32 %v1192, %v1778
        %1780 = vmatmul.mubr.f32.gmra.mxu0 %v1779
        %v1781 = vpop.f32.mrf.mxu0
        %v1782 = vadd.f32 %v1599, %v1781
        %v1783 = vpop.f32.mrf.mxu0
        %1784 = vmatprep.mubr.f32.mxu0 0.0
        %v1785 = vand.u32 %v1195, 4294901760
        %v1786 = vsub.f32 %v1195, %v1785
        %1787 = vmatmul.mubr.f32.gmra.mxu0 %v1786
        %v1788 = vpop.f32.mrf.mxu0
        %v1789 = vadd.f32 %v1605, %v1788
        %v1790 = vpop.f32.mrf.mxu0
        %1791 = vmatprep.mubr.f32.mxu0 0.0
        %v1792 = vand.u32 %v1198, 4294901760
        %v1793 = vsub.f32 %v1198, %v1792
        %1794 = vmatmul.mubr.f32.gmra.mxu0 %v1793
        %v1795 = vpop.f32.mrf.mxu0
        %v1796 = vadd.f32 %v1611, %v1795
        %v1797 = vpop.f32.mrf.mxu0
        %1798 = vmatprep.mubr.f32.mxu0 0.0
        %v1799 = vand.u32 %v1201, 4294901760
        %v1800 = vsub.f32 %v1201, %v1799
        %1801 = vmatmul.mubr.f32.gmra.mxu0 %v1800
        %v1802 = vpop.f32.mrf.mxu0
        %v1803 = vadd.f32 %v1617, %v1802
        %v1804 = vpop.f32.mrf.mxu0
        %1805 = vmatprep.mubr.f32.mxu0 0.0
        %v1806 = vand.u32 %v1204, 4294901760
        %v1807 = vsub.f32 %v1204, %v1806
        %1808 = vmatmul.mubr.f32.gmra.mxu0 %v1807
        %v1809 = vpop.f32.mrf.mxu0
        %v1810 = vadd.f32 %v1623, %v1809
        %v1811 = vpop.f32.mrf.mxu0
        %1812 = vdwg.mxu0
        %1813 = vmatprep.subr.mxu0 0.0
        %1814 = vmatpush1.msra.mxu0 0.0
        %1815 = vmatprep.subr.mxu0 0.0
        %1816 = vmatpush1.msra.mxu0 0.0
        %1817 = vmatprep.subr.mxu0 0.0
        %1818 = vmatpush1.msra.mxu0 0.0
        %1819 = vmatprep.subr.mxu0 0.0
        %1820 = vmatpush1.msra.mxu0 0.0
        %1821 = vmatprep.subr.mxu0 0.0
        %1822 = vmatpush1.msra.mxu0 0.0
        %1823 = vmatprep.subr.mxu0 0.0
        %1824 = vmatpush1.msra.mxu0 0.0
        %1825 = vmatprep.subr.mxu0 0.0
        %1826 = vmatpush1.msra.mxu0 0.0
        %1827 = vmatprep.subr.mxu0 0.0
        %1828 = vmatpush1.msra.mxu0 0.0
        %1829 = vmatprep.subr.mxu0 0.0
        %1830 = vmatpush1.msra.mxu0 0.0
        %1831 = vmatprep.subr.mxu0 0.0
        %1832 = vmatpush1.msra.mxu0 0.0
        %1833 = vmatprep.subr.mxu0 0.0
        %1834 = vmatpush1.msra.mxu0 0.0
        %1835 = vmatprep.subr.mxu0 0.0
        %v1836 = vand.u32 %v1208, 4294901760
        %1837 = vmatpush1.msra.mxu0 %v1836
        %1838 = vmatprep.subr.mxu0 0.0
        %v1839 = vand.u32 %v1148, 4294901760
        %1840 = vmatpush1.msra.mxu0 %v1839
        %1841 = vmatprep.subr.mxu0 0.0
        %v1842 = vand.u32 %v1147, 4294901760
        %1843 = vmatpush1.msra.mxu0 %v1842
        %1844 = vmatprep.subr.mxu0 0.0
        %v1845 = vand.u32 %v1146, 4294901760
        %1846 = vmatpush1.msra.mxu0 %v1845
        %1847 = vmatprep.subr.mxu0 0.0
        %v1848 = vand.u32 %v1145, 4294901760
        %1849 = vmatpush1.msra.mxu0 %v1848
        %1850 = vmatprep.subr.mxu0 0.0
        %1851 = vmatpush2.msra.mxu0 0.0
        %1852 = vmatprep.subr.mxu0 0.0
        %1853 = vmatpush2.msra.mxu0 0.0
        %1854 = vmatprep.subr.mxu0 0.0
        %1855 = vmatpush2.msra.mxu0 0.0
        %1856 = vmatprep.subr.mxu0 0.0
        %1857 = vmatpush2.msra.mxu0 0.0
        %1858 = vmatprep.subr.mxu0 0.0
        %1859 = vmatpush2.msra.mxu0 0.0
        %1860 = vmatprep.subr.mxu0 0.0
        %1861 = vmatpush2.msra.mxu0 0.0
        %1862 = vmatprep.subr.mxu0 0.0
        %1863 = vmatpush2.msra.mxu0 0.0
        %1864 = vmatprep.subr.mxu0 0.0
        %1865 = vmatpush2.msra.mxu0 0.0
        %1866 = vmatprep.subr.mxu0 0.0
        %1867 = vmatpush2.msra.mxu0 0.0
        %1868 = vmatprep.subr.mxu0 0.0
        %1869 = vmatpush2.msra.mxu0 0.0
        %1870 = vmatprep.subr.mxu0 0.0
        %1871 = vmatpush2.msra.mxu0 0.0
        %1872 = vmatprep.subr.mxu0 0.0
        %1873 = vmatpush2.msra.mxu0 0.0
        %1874 = vmatprep.subr.mxu0 0.0
        %1875 = vmatpush2.msra.mxu0 0.0
        %1876 = vmatprep.subr.mxu0 0.0
        %1877 = vmatpush2.msra.mxu0 0.0
        %1878 = vmatprep.subr.mxu0 0.0
        %1879 = vmatpush2.msra.mxu0 0.0
        %1880 = vmatprep.subr.mxu0 0.0
        %1881 = vmatpush2.msra.mxu0 0.0
        %1882 = vmatprep.mubr.f32.mxu0 0.0
        %v1883 = vand.u32 %v1159, 4294901760
        %v1884 = vsub.f32 %v1159, %v1883
        %v1885 = vand.u32 %v1884, 4294901760
        %1886 = vmatmul.mubr.f32.gmra.mxu0 %v1885
        %v1887 = vpop.f32.mrf.mxu0
        %v1888 = vadd.f32 %v1705, %v1887
        %v1889 = vpop.f32.mrf.mxu0
        %1890 = vmatprep.mubr.f32.mxu0 0.0
        %v1891 = vand.u32 %v1162, 4294901760
        %v1892 = vsub.f32 %v1162, %v1891
        %v1893 = vand.u32 %v1892, 4294901760
        %1894 = vmatmul.mubr.f32.gmra.mxu0 %v1893
        %v1895 = vpop.f32.mrf.mxu0
        %v1896 = vadd.f32 %v1712, %v1895
        %v1897 = vpop.f32.mrf.mxu0
        %1898 = vmatprep.mubr.f32.mxu0 0.0
        %v1899 = vand.u32 %v1165, 4294901760
        %v1900 = vsub.f32 %v1165, %v1899
        %v1901 = vand.u32 %v1900, 4294901760
        %1902 = vmatmul.mubr.f32.gmra.mxu0 %v1901
        %v1903 = vpop.f32.mrf.mxu0
        %v1904 = vadd.f32 %v1719, %v1903
        %v1905 = vpop.f32.mrf.mxu0
        %1906 = vmatprep.mubr.f32.mxu0 0.0
        %v1907 = vand.u32 %v1168, 4294901760
        %v1908 = vsub.f32 %v1168, %v1907
        %v1909 = vand.u32 %v1908, 4294901760
        %1910 = vmatmul.mubr.f32.gmra.mxu0 %v1909
        %v1911 = vpop.f32.mrf.mxu0
        %v1912 = vadd.f32 %v1726, %v1911
        %v1913 = vpop.f32.mrf.mxu0
        %1914 = vmatprep.mubr.f32.mxu0 0.0
        %v1915 = vand.u32 %v1171, 4294901760
        %v1916 = vsub.f32 %v1171, %v1915
        %v1917 = vand.u32 %v1916, 4294901760
        %1918 = vmatmul.mubr.f32.gmra.mxu0 %v1917
        %v1919 = vpop.f32.mrf.mxu0
        %v1920 = vadd.f32 %v1733, %v1919
        %v1921 = vpop.f32.mrf.mxu0
        %1922 = vmatprep.mubr.f32.mxu0 0.0
        %v1923 = vand.u32 %v1174, 4294901760
        %v1924 = vsub.f32 %v1174, %v1923
        %v1925 = vand.u32 %v1924, 4294901760
        %1926 = vmatmul.mubr.f32.gmra.mxu0 %v1925
        %v1927 = vpop.f32.mrf.mxu0
        %v1928 = vadd.f32 %v1740, %v1927
        %v1929 = vpop.f32.mrf.mxu0
        %1930 = vmatprep.mubr.f32.mxu0 0.0
        %v1931 = vand.u32 %v1177, 4294901760
        %v1932 = vsub.f32 %v1177, %v1931
        %v1933 = vand.u32 %v1932, 4294901760
        %1934 = vmatmul.mubr.f32.gmra.mxu0 %v1933
        %v1935 = vpop.f32.mrf.mxu0
        %v1936 = vadd.f32 %v1747, %v1935
        %v1937 = vpop.f32.mrf.mxu0
        %1938 = vmatprep.mubr.f32.mxu0 0.0
        %v1939 = vand.u32 %v1180, 4294901760
        %v1940 = vsub.f32 %v1180, %v1939
        %v1941 = vand.u32 %v1940, 4294901760
        %1942 = vmatmul.mubr.f32.gmra.mxu0 %v1941
        %v1943 = vpop.f32.mrf.mxu0
        %v1944 = vadd.f32 %v1754, %v1943
        %v1945 = vpop.f32.mrf.mxu0
        %1946 = vmatprep.mubr.f32.mxu0 0.0
        %v1947 = vand.u32 %v1183, 4294901760
        %v1948 = vsub.f32 %v1183, %v1947
        %v1949 = vand.u32 %v1948, 4294901760
        %1950 = vmatmul.mubr.f32.gmra.mxu0 %v1949
        %v1951 = vpop.f32.mrf.mxu0
        %v1952 = vadd.f32 %v1761, %v1951
        %v1953 = vpop.f32.mrf.mxu0
        %1954 = vmatprep.mubr.f32.mxu0 0.0
        %v1955 = vand.u32 %v1186, 4294901760
        %v1956 = vsub.f32 %v1186, %v1955
        %v1957 = vand.u32 %v1956, 4294901760
        %1958 = vmatmul.mubr.f32.gmra.mxu0 %v1957
        %v1959 = vpop.f32.mrf.mxu0
        %v1960 = vadd.f32 %v1768, %v1959
        %v1961 = vpop.f32.mrf.mxu0
        %1962 = vmatprep.mubr.f32.mxu0 0.0
        %v1963 = vand.u32 %v1189, 4294901760
        %v1964 = vsub.f32 %v1189, %v1963
        %v1965 = vand.u32 %v1964, 4294901760
        %1966 = vmatmul.mubr.f32.gmra.mxu0 %v1965
        %v1967 = vpop.f32.mrf.mxu0
        %v1968 = vadd.f32 %v1775, %v1967
        %v1969 = vpop.f32.mrf.mxu0
        %1970 = vmatprep.mubr.f32.mxu0 0.0
        %v1971 = vand.u32 %v1192, 4294901760
        %v1972 = vsub.f32 %v1192, %v1971
        %v1973 = vand.u32 %v1972, 4294901760
        %1974 = vmatmul.mubr.f32.gmra.mxu0 %v1973
        %v1975 = vpop.f32.mrf.mxu0
        %v1976 = vadd.f32 %v1782, %v1975
        %v1977 = vpop.f32.mrf.mxu0
        %1978 = vmatprep.mubr.f32.mxu0 0.0
        %v1979 = vand.u32 %v1195, 4294901760
        %v1980 = vsub.f32 %v1195, %v1979
        %v1981 = vand.u32 %v1980, 4294901760
        %1982 = vmatmul.mubr.f32.gmra.mxu0 %v1981
        %v1983 = vpop.f32.mrf.mxu0
        %v1984 = vadd.f32 %v1789, %v1983
        %v1985 = vpop.f32.mrf.mxu0
        %1986 = vmatprep.mubr.f32.mxu0 0.0
        %v1987 = vand.u32 %v1198, 4294901760
        %v1988 = vsub.f32 %v1198, %v1987
        %v1989 = vand.u32 %v1988, 4294901760
        %1990 = vmatmul.mubr.f32.gmra.mxu0 %v1989
        %v1991 = vpop.f32.mrf.mxu0
        %v1992 = vadd.f32 %v1796, %v1991
        %v1993 = vpop.f32.mrf.mxu0
        %1994 = vmatprep.mubr.f32.mxu0 0.0
        %v1995 = vand.u32 %v1201, 4294901760
        %v1996 = vsub.f32 %v1201, %v1995
        %v1997 = vand.u32 %v1996, 4294901760
        %1998 = vmatmul.mubr.f32.gmra.mxu0 %v1997
        %v1999 = vpop.f32.mrf.mxu0
        %v2000 = vadd.f32 %v1803, %v1999
        %v2001 = vpop.f32.mrf.mxu0
        %2002 = vmatprep.mubr.f32.mxu0 0.0
        %v2003 = vand.u32 %v1204, 4294901760
        %v2004 = vsub.f32 %v1204, %v2003
        %v2005 = vand.u32 %v2004, 4294901760
        %2006 = vmatmul.mubr.f32.gmra.mxu0 %v2005
        %v2007 = vpop.f32.mrf.mxu0
        %v2008 = vadd.f32 %v1810, %v2007
        %v2009 = vpop.f32.mrf.mxu0
        %2010 = vdwg.mxu0
        %2011 = vmatprep.subr.mxu0 0.0
        %2012 = vmatpush1.msra.mxu0 0.0
        %2013 = vmatprep.subr.mxu0 0.0
        %2014 = vmatpush1.msra.mxu0 0.0
        %2015 = vmatprep.subr.mxu0 0.0
        %2016 = vmatpush1.msra.mxu0 0.0
        %2017 = vmatprep.subr.mxu0 0.0
        %2018 = vmatpush1.msra.mxu0 0.0
        %2019 = vmatprep.subr.mxu0 0.0
        %2020 = vmatpush1.msra.mxu0 0.0
        %2021 = vmatprep.subr.mxu0 0.0
        %2022 = vmatpush1.msra.mxu0 0.0
        %2023 = vmatprep.subr.mxu0 0.0
        %2024 = vmatpush1.msra.mxu0 0.0
        %2025 = vmatprep.subr.mxu0 0.0
        %2026 = vmatpush1.msra.mxu0 0.0
        %2027 = vmatprep.subr.mxu0 0.0
        %2028 = vmatpush1.msra.mxu0 0.0
        %2029 = vmatprep.subr.mxu0 0.0
        %2030 = vmatpush1.msra.mxu0 0.0
        %2031 = vmatprep.subr.mxu0 0.0
        %2032 = vmatpush1.msra.mxu0 0.0
        %2033 = vmatprep.subr.mxu0 0.0
        %v2034 = vand.u32 %v1208, 4294901760
        %v2035 = vsub.f32 %v1208, %v2034
        %v2036 = vand.u32 %v2035, 4294901760
        %2037 = vmatpush1.msra.mxu0 %v2036
        %2038 = vmatprep.subr.mxu0 0.0
        %v2039 = vand.u32 %v1148, 4294901760
        %v2040 = vsub.f32 %v1148, %v2039
        %v2041 = vand.u32 %v2040, 4294901760
        %2042 = vmatpush1.msra.mxu0 %v2041
        %2043 = vmatprep.subr.mxu0 0.0
        %v2044 = vand.u32 %v1147, 4294901760
        %v2045 = vsub.f32 %v1147, %v2044
        %v2046 = vand.u32 %v2045, 4294901760
        %2047 = vmatpush1.msra.mxu0 %v2046
        %2048 = vmatprep.subr.mxu0 0.0
        %v2049 = vand.u32 %v1146, 4294901760
        %v2050 = vsub.f32 %v1146, %v2049
        %v2051 = vand.u32 %v2050, 4294901760
        %2052 = vmatpush1.msra.mxu0 %v2051
        %2053 = vmatprep.subr.mxu0 0.0
        %v2054 = vand.u32 %v1145, 4294901760
        %v2055 = vsub.f32 %v1145, %v2054
        %v2056 = vand.u32 %v2055, 4294901760
        %2057 = vmatpush1.msra.mxu0 %v2056
        %2058 = vmatprep.subr.mxu0 0.0
        %2059 = vmatpush2.msra.mxu0 0.0
        %2060 = vmatprep.subr.mxu0 0.0
        %2061 = vmatpush2.msra.mxu0 0.0
        %2062 = vmatprep.subr.mxu0 0.0
        %2063 = vmatpush2.msra.mxu0 0.0
        %2064 = vmatprep.subr.mxu0 0.0
        %2065 = vmatpush2.msra.mxu0 0.0
        %2066 = vmatprep.subr.mxu0 0.0
        %2067 = vmatpush2.msra.mxu0 0.0
        %2068 = vmatprep.subr.mxu0 0.0
        %2069 = vmatpush2.msra.mxu0 0.0
        %2070 = vmatprep.subr.mxu0 0.0
        %2071 = vmatpush2.msra.mxu0 0.0
        %2072 = vmatprep.subr.mxu0 0.0
        %2073 = vmatpush2.msra.mxu0 0.0
        %2074 = vmatprep.subr.mxu0 0.0
        %2075 = vmatpush2.msra.mxu0 0.0
        %2076 = vmatprep.subr.mxu0 0.0
        %2077 = vmatpush2.msra.mxu0 0.0
        %2078 = vmatprep.subr.mxu0 0.0
        %2079 = vmatpush2.msra.mxu0 0.0
        %2080 = vmatprep.subr.mxu0 0.0
        %2081 = vmatpush2.msra.mxu0 0.0
        %2082 = vmatprep.subr.mxu0 0.0
        %2083 = vmatpush2.msra.mxu0 0.0
        %2084 = vmatprep.subr.mxu0 0.0
        %2085 = vmatpush2.msra.mxu0 0.0
        %2086 = vmatprep.subr.mxu0 0.0
        %2087 = vmatpush2.msra.mxu0 0.0
        %2088 = vmatprep.subr.mxu0 0.0
        %2089 = vmatpush2.msra.mxu0 0.0
        %2090 = vmatprep.mubr.f32.mxu0 0.0
        %v2091 = vand.u32 %v1159, 4294901760
        %2092 = vmatmul.mubr.f32.gmra.mxu0 %v2091
        %v2093 = vpop.f32.mrf.mxu0
        %v2094 = vadd.f32 %v1888, %v2093
        %v2095 = vpop.f32.mrf.mxu0
        %2096 = vmatprep.mubr.f32.mxu0 0.0
        %v2097 = vand.u32 %v1162, 4294901760
        %2098 = vmatmul.mubr.f32.gmra.mxu0 %v2097
        %v2099 = vpop.f32.mrf.mxu0
        %v2100 = vadd.f32 %v1896, %v2099
        %v2101 = vpop.f32.mrf.mxu0
        %2102 = vmatprep.mubr.f32.mxu0 0.0
        %v2103 = vand.u32 %v1165, 4294901760
        %2104 = vmatmul.mubr.f32.gmra.mxu0 %v2103
        %v2105 = vpop.f32.mrf.mxu0
        %v2106 = vadd.f32 %v1904, %v2105
        %v2107 = vpop.f32.mrf.mxu0
        %2108 = vmatprep.mubr.f32.mxu0 0.0
        %v2109 = vand.u32 %v1168, 4294901760
        %2110 = vmatmul.mubr.f32.gmra.mxu0 %v2109
        %v2111 = vpop.f32.mrf.mxu0
        %v2112 = vadd.f32 %v1912, %v2111
        %v2113 = vpop.f32.mrf.mxu0
        %2114 = vmatprep.mubr.f32.mxu0 0.0
        %v2115 = vand.u32 %v1171, 4294901760
        %2116 = vmatmul.mubr.f32.gmra.mxu0 %v2115
        %v2117 = vpop.f32.mrf.mxu0
        %v2118 = vadd.f32 %v1920, %v2117
        %v2119 = vpop.f32.mrf.mxu0
        %2120 = vmatprep.mubr.f32.mxu0 0.0
        %v2121 = vand.u32 %v1174, 4294901760
        %2122 = vmatmul.mubr.f32.gmra.mxu0 %v2121
        %v2123 = vpop.f32.mrf.mxu0
        %v2124 = vadd.f32 %v1928, %v2123
        %v2125 = vpop.f32.mrf.mxu0
        %2126 = vmatprep.mubr.f32.mxu0 0.0
        %v2127 = vand.u32 %v1177, 4294901760
        %2128 = vmatmul.mubr.f32.gmra.mxu0 %v2127
        %v2129 = vpop.f32.mrf.mxu0
        %v2130 = vadd.f32 %v1936, %v2129
        %v2131 = vpop.f32.mrf.mxu0
        %2132 = vmatprep.mubr.f32.mxu0 0.0
        %v2133 = vand.u32 %v1180, 4294901760
        %2134 = vmatmul.mubr.f32.gmra.mxu0 %v2133
        %v2135 = vpop.f32.mrf.mxu0
        %v2136 = vadd.f32 %v1944, %v2135
        %v2137 = vpop.f32.mrf.mxu0
        %2138 = vmatprep.mubr.f32.mxu0 0.0
        %v2139 = vand.u32 %v1183, 4294901760
        %2140 = vmatmul.mubr.f32.gmra.mxu0 %v2139
        %v2141 = vpop.f32.mrf.mxu0
        %v2142 = vadd.f32 %v1952, %v2141
        %v2143 = vpop.f32.mrf.mxu0
        %2144 = vmatprep.mubr.f32.mxu0 0.0
        %v2145 = vand.u32 %v1186, 4294901760
        %2146 = vmatmul.mubr.f32.gmra.mxu0 %v2145
        %v2147 = vpop.f32.mrf.mxu0
        %v2148 = vadd.f32 %v1960, %v2147
        %v2149 = vpop.f32.mrf.mxu0
        %2150 = vmatprep.mubr.f32.mxu0 0.0
        %v2151 = vand.u32 %v1189, 4294901760
        %2152 = vmatmul.mubr.f32.gmra.mxu0 %v2151
        %v2153 = vpop.f32.mrf.mxu0
        %v2154 = vadd.f32 %v1968, %v2153
        %v2155 = vpop.f32.mrf.mxu0
        %2156 = vmatprep.mubr.f32.mxu0 0.0
        %v2157 = vand.u32 %v1192, 4294901760
        %2158 = vmatmul.mubr.f32.gmra.mxu0 %v2157
        %v2159 = vpop.f32.mrf.mxu0
        %v2160 = vadd.f32 %v1976, %v2159
        %v2161 = vpop.f32.mrf.mxu0
        %2162 = vmatprep.mubr.f32.mxu0 0.0
        %v2163 = vand.u32 %v1195, 4294901760
        %2164 = vmatmul.mubr.f32.gmra.mxu0 %v2163
        %v2165 = vpop.f32.mrf.mxu0
        %v2166 = vadd.f32 %v1984, %v2165
        %v2167 = vpop.f32.mrf.mxu0
        %2168 = vmatprep.mubr.f32.mxu0 0.0
        %v2169 = vand.u32 %v1198, 4294901760
        %2170 = vmatmul.mubr.f32.gmra.mxu0 %v2169
        %v2171 = vpop.f32.mrf.mxu0
        %v2172 = vadd.f32 %v1992, %v2171
        %v2173 = vpop.f32.mrf.mxu0
        %2174 = vmatprep.mubr.f32.mxu0 0.0
        %v2175 = vand.u32 %v1201, 4294901760
        %2176 = vmatmul.mubr.f32.gmra.mxu0 %v2175
        %v2177 = vpop.f32.mrf.mxu0
        %v2178 = vadd.f32 %v2000, %v2177
        %v2179 = vpop.f32.mrf.mxu0
        %2180 = vmatprep.mubr.f32.mxu0 0.0
        %v2181 = vand.u32 %v1204, 4294901760
        %2182 = vmatmul.mubr.f32.gmra.mxu0 %v2181
        %v2183 = vpop.f32.mrf.mxu0
        %v2184 = vadd.f32 %v2008, %v2183
        %v2185 = vpop.f32.mrf.mxu0
        %2186 = vdwg.mxu0
        %2187 = vmatprep.subr.mxu0 0.0
        %2188 = vmatpush1.msra.mxu0 0.0
        %2189 = vmatprep.subr.mxu0 0.0
        %2190 = vmatpush1.msra.mxu0 0.0
        %2191 = vmatprep.subr.mxu0 0.0
        %2192 = vmatpush1.msra.mxu0 0.0
        %2193 = vmatprep.subr.mxu0 0.0
        %2194 = vmatpush1.msra.mxu0 0.0
        %2195 = vmatprep.subr.mxu0 0.0
        %2196 = vmatpush1.msra.mxu0 0.0
        %2197 = vmatprep.subr.mxu0 0.0
        %2198 = vmatpush1.msra.mxu0 0.0
        %2199 = vmatprep.subr.mxu0 0.0
        %2200 = vmatpush1.msra.mxu0 0.0
        %2201 = vmatprep.subr.mxu0 0.0
        %2202 = vmatpush1.msra.mxu0 0.0
        %2203 = vmatprep.subr.mxu0 0.0
        %2204 = vmatpush1.msra.mxu0 0.0
        %2205 = vmatprep.subr.mxu0 0.0
        %2206 = vmatpush1.msra.mxu0 0.0
        %2207 = vmatprep.subr.mxu0 0.0
        %2208 = vmatpush1.msra.mxu0 0.0
        %2209 = vmatprep.subr.mxu0 0.0
        %v2210 = vand.u32 %v1208, 4294901760
        %2211 = vmatpush1.msra.mxu0 %v2210
        %2212 = vmatprep.subr.mxu0 0.0
        %v2213 = vand.u32 %v1148, 4294901760
        %2214 = vmatpush1.msra.mxu0 %v2213
        %2215 = vmatprep.subr.mxu0 0.0
        %v2216 = vand.u32 %v1147, 4294901760
        %2217 = vmatpush1.msra.mxu0 %v2216
        %2218 = vmatprep.subr.mxu0 0.0
        %v2219 = vand.u32 %v1146, 4294901760
        %2220 = vmatpush1.msra.mxu0 %v2219
        %2221 = vmatprep.subr.mxu0 0.0
        %v2222 = vand.u32 %v1145, 4294901760
        %2223 = vmatpush1.msra.mxu0 %v2222
        %2224 = vmatprep.subr.mxu0 0.0
        %2225 = vmatpush2.msra.mxu0 0.0
        %2226 = vmatprep.subr.mxu0 0.0
        %2227 = vmatpush2.msra.mxu0 0.0
        %2228 = vmatprep.subr.mxu0 0.0
        %2229 = vmatpush2.msra.mxu0 0.0
        %2230 = vmatprep.subr.mxu0 0.0
        %2231 = vmatpush2.msra.mxu0 0.0
        %2232 = vmatprep.subr.mxu0 0.0
        %2233 = vmatpush2.msra.mxu0 0.0
        %2234 = vmatprep.subr.mxu0 0.0
        %2235 = vmatpush2.msra.mxu0 0.0
        %2236 = vmatprep.subr.mxu0 0.0
        %2237 = vmatpush2.msra.mxu0 0.0
        %2238 = vmatprep.subr.mxu0 0.0
        %2239 = vmatpush2.msra.mxu0 0.0
        %2240 = vmatprep.subr.mxu0 0.0
        %2241 = vmatpush2.msra.mxu0 0.0
        %2242 = vmatprep.subr.mxu0 0.0
        %2243 = vmatpush2.msra.mxu0 0.0
        %2244 = vmatprep.subr.mxu0 0.0
        %2245 = vmatpush2.msra.mxu0 0.0
        %2246 = vmatprep.subr.mxu0 0.0
        %2247 = vmatpush2.msra.mxu0 0.0
        %2248 = vmatprep.subr.mxu0 0.0
        %2249 = vmatpush2.msra.mxu0 0.0
        %2250 = vmatprep.subr.mxu0 0.0
        %2251 = vmatpush2.msra.mxu0 0.0
        %2252 = vmatprep.subr.mxu0 0.0
        %2253 = vmatpush2.msra.mxu0 0.0
        %2254 = vmatprep.subr.mxu0 0.0
        %2255 = vmatpush2.msra.mxu0 0.0
        %2256 = vmatprep.mubr.f32.mxu0 0.0
        %v2257 = vand.u32 %v1159, 4294901760
        %2258 = vmatmul.mubr.f32.gmra.mxu0 %v2257
        %v2259 = vpop.f32.mrf.mxu0
        %v2260 = vadd.f32 %v2094, %v2259
        %v2261 = vpop.f32.mrf.mxu0
        %2262 = vmatprep.mubr.f32.mxu0 0.0
        %v2263 = vand.u32 %v1162, 4294901760
        %2264 = vmatmul.mubr.f32.gmra.mxu0 %v2263
        %v2265 = vpop.f32.mrf.mxu0
        %v2266 = vadd.f32 %v2100, %v2265
        %v2267 = vpop.f32.mrf.mxu0
        %2268 = vmatprep.mubr.f32.mxu0 0.0
        %v2269 = vand.u32 %v1165, 4294901760
        %2270 = vmatmul.mubr.f32.gmra.mxu0 %v2269
        %v2271 = vpop.f32.mrf.mxu0
        %v2272 = vadd.f32 %v2106, %v2271
        %v2273 = vpop.f32.mrf.mxu0
        %2274 = vmatprep.mubr.f32.mxu0 0.0
        %v2275 = vand.u32 %v1168, 4294901760
        %2276 = vmatmul.mubr.f32.gmra.mxu0 %v2275
        %v2277 = vpop.f32.mrf.mxu0
        %v2278 = vadd.f32 %v2112, %v2277
        %v2279 = vpop.f32.mrf.mxu0
        %2280 = vmatprep.mubr.f32.mxu0 0.0
        %v2281 = vand.u32 %v1171, 4294901760
        %2282 = vmatmul.mubr.f32.gmra.mxu0 %v2281
        %v2283 = vpop.f32.mrf.mxu0
        %v2284 = vadd.f32 %v2118, %v2283
        %v2285 = vpop.f32.mrf.mxu0
        %2286 = vmatprep.mubr.f32.mxu0 0.0
        %v2287 = vand.u32 %v1174, 4294901760
        %2288 = vmatmul.mubr.f32.gmra.mxu0 %v2287
        %v2289 = vpop.f32.mrf.mxu0
        %v2290 = vadd.f32 %v2124, %v2289
        %v2291 = vpop.f32.mrf.mxu0
        %2292 = vmatprep.mubr.f32.mxu0 0.0
        %v2293 = vand.u32 %v1177, 4294901760
        %2294 = vmatmul.mubr.f32.gmra.mxu0 %v2293
        %v2295 = vpop.f32.mrf.mxu0
        %v2296 = vadd.f32 %v2130, %v2295
        %v2297 = vpop.f32.mrf.mxu0
        %2298 = vmatprep.mubr.f32.mxu0 0.0
        %v2299 = vand.u32 %v1180, 4294901760
        %2300 = vmatmul.mubr.f32.gmra.mxu0 %v2299
        %v2301 = vpop.f32.mrf.mxu0
        %v2302 = vadd.f32 %v2136, %v2301
        %v2303 = vpop.f32.mrf.mxu0
        %2304 = vmatprep.mubr.f32.mxu0 0.0
        %v2305 = vand.u32 %v1183, 4294901760
        %2306 = vmatmul.mubr.f32.gmra.mxu0 %v2305
        %v2307 = vpop.f32.mrf.mxu0
        %v2308 = vadd.f32 %v2142, %v2307
        %v2309 = vpop.f32.mrf.mxu0
        %2310 = vmatprep.mubr.f32.mxu0 0.0
        %v2311 = vand.u32 %v1186, 4294901760
        %2312 = vmatmul.mubr.f32.gmra.mxu0 %v2311
        %v2313 = vpop.f32.mrf.mxu0
        %v2314 = vadd.f32 %v2148, %v2313
        %v2315 = vpop.f32.mrf.mxu0
        %2316 = vmatprep.mubr.f32.mxu0 0.0
        %v2317 = vand.u32 %v1189, 4294901760
        %2318 = vmatmul.mubr.f32.gmra.mxu0 %v2317
        %v2319 = vpop.f32.mrf.mxu0
        %v2320 = vadd.f32 %v2154, %v2319
        %v2321 = vpop.f32.mrf.mxu0
        %2322 = vmatprep.mubr.f32.mxu0 0.0
        %v2323 = vand.u32 %v1192, 4294901760
        %2324 = vmatmul.mubr.f32.gmra.mxu0 %v2323
        %v2325 = vpop.f32.mrf.mxu0
        %v2326 = vadd.f32 %v2160, %v2325
        %v2327 = vpop.f32.mrf.mxu0
        %2328 = vmatprep.mubr.f32.mxu0 0.0
        %v2329 = vand.u32 %v1195, 4294901760
        %2330 = vmatmul.mubr.f32.gmra.mxu0 %v2329
        %v2331 = vpop.f32.mrf.mxu0
        %v2332 = vadd.f32 %v2166, %v2331
        %v2333 = vpop.f32.mrf.mxu0
        %2334 = vmatprep.mubr.f32.mxu0 0.0
        %v2335 = vand.u32 %v1198, 4294901760
        %2336 = vmatmul.mubr.f32.gmra.mxu0 %v2335
        %v2337 = vpop.f32.mrf.mxu0
        %v2338 = vadd.f32 %v2172, %v2337
        %v2339 = vpop.f32.mrf.mxu0
        %2340 = vmatprep.mubr.f32.mxu0 0.0
        %v2341 = vand.u32 %v1201, 4294901760
        %2342 = vmatmul.mubr.f32.gmra.mxu0 %v2341
        %v2343 = vpop.f32.mrf.mxu0
        %v2344 = vadd.f32 %v2178, %v2343
        %v2345 = vpop.f32.mrf.mxu0
        %2346 = vmatprep.mubr.f32.mxu0 0.0
        %v2347 = vand.u32 %v1204, 4294901760
        %2348 = vmatmul.mubr.f32.gmra.mxu0 %v2347
        %v2349 = vpop.f32.mrf.mxu0
        %v2350 = vadd.f32 %v2184, %v2349
        %v2351 = vpop.f32.mrf.mxu0
        %2352 = vdwg.mxu0
        %vm2353 = vcmp.ge.f32.partialorder %v2260, 0.0
        %vm2354 = vcmp.ge.f32.partialorder %v2266, 0.0
        %vm2355 = vcmp.ge.f32.partialorder %v2272, 0.0
        %vm2356 = vcmp.ge.f32.partialorder %v2278, 0.0
        %vm2357 = vcmp.ge.f32.partialorder %v2284, 0.0
        %vm2358 = vcmp.ge.f32.partialorder %v2290, 0.0
        %vm2359 = vcmp.ge.f32.partialorder %v2296, 0.0
        %vm2360 = vcmp.ge.f32.partialorder %v2302, 0.0
        %vm2361 = vcmp.ge.f32.partialorder %v2308, 0.0
        %vm2362 = vcmp.ge.f32.partialorder %v2314, 0.0
        %vm2363 = vcmp.ge.f32.partialorder %v2320, 0.0
        %vm2364 = vcmp.ge.f32.partialorder %v2326, 0.0
        %vm2365 = vcmp.ge.f32.partialorder %v2332, 0.0
        %vm2366 = vcmp.ge.f32.partialorder %v2338, 0.0
        %vm2367 = vcmp.ge.f32.partialorder %v2344, 0.0
        %vm2368 = vcmp.ge.f32.partialorder %v2350, 0.0
        %s2369 = sld [smem:[#allocation2]]
        %v2370 = vstv %s2369
        %v2371 = vmul.f32 %v2370, %v2260
        %v2372 = vmul.f32 %v2370, %v2266
        %v2373 = vmul.f32 %v2370, %v2272
        %v2374 = vmul.f32 %v2370, %v2278
        %v2375 = vmul.f32 %v2370, %v2284
        %v2376 = vmul.f32 %v2370, %v2290
        %v2377 = vmul.f32 %v2370, %v2296
        %v2378 = vmul.f32 %v2370, %v2302
        %v2379 = vmul.f32 %v2370, %v2308
        %v2380 = vmul.f32 %v2370, %v2314
        %v2381 = vmul.f32 %v2370, %v2320
        %v2382 = vmul.f32 %v2370, %v2326
        %v2383 = vmul.f32 %v2370, %v2332
        %v2384 = vmul.f32 %v2370, %v2338
        %v2385 = vmul.f32 %v2370, %v2344
        %v2386 = vmul.f32 %v2370, %v2350
        %v2387 = vsel %vm2353, %v2260, %v2371
        %v2388 = vsel %vm2354, %v2266, %v2372
        %v2389 = vsel %vm2355, %v2272, %v2373
        %v2390 = vsel %vm2356, %v2278, %v2374
        %v2391 = vsel %vm2357, %v2284, %v2375
        %v2392 = vsel %vm2358, %v2290, %v2376
        %v2393 = vsel %vm2359, %v2296, %v2377
        %v2394 = vsel %vm2360, %v2302, %v2378
        %v2395 = vsel %vm2361, %v2308, %v2379
        %v2396 = vsel %vm2362, %v2314, %v2380
        %v2397 = vsel %vm2363, %v2320, %v2381
        %v2398 = vsel %vm2364, %v2326, %v2382
        %v2399 = vsel %vm2365, %v2332, %v2383
        %v2400 = vsel %vm2366, %v2338, %v2384
        %v2401 = vsel %vm2367, %v2344, %v2385
        %v2402 = vsel %vm2368, %v2350, %v2386
        %2403 = vst.msk [vmem:[%s358] sm:$0xff] %vm1060, %v2387
        %2404 = vst.msk [vmem:[%s358 + $0x8] sm:$0xff] %vm1060, %v2388
        %2405 = vst.msk [vmem:[%s358 + $0x10] sm:$0xff] %vm1060, %v2389
        %2406 = vst.msk [vmem:[%s358 + $0x18] sm:$0xff] %vm1060, %v2390
        %2407 = vst.msk [vmem:[%s358 + $0x20] sm:$0xff] %vm1060, %v2391
        %2408 = vst.msk [vmem:[%s358 + $0x28] sm:$0xff] %vm1060, %v2392
        %2409 = vst.msk [vmem:[%s358 + $0x30] sm:$0xff] %vm1060, %v2393
        %2410 = vst.msk [vmem:[%s358 + $0x38] sm:$0xff] %vm1060, %v2394
        %2411 = vst.msk [vmem:[%s358 + $0x40] sm:$0xff] %vm1060, %v2395
        %2412 = vst.msk [vmem:[%s358 + $0x48] sm:$0xff] %vm1060, %v2396
        %2413 = vst.msk [vmem:[%s358 + $0x50] sm:$0xff] %vm1060, %v2397
        %2414 = vst.msk [vmem:[%s358 + $0x58] sm:$0xff] %vm1060, %v2398
        %2415 = vst.msk [vmem:[%s358 + $0x60] sm:$0xff] %vm1060, %v2399
        %2416 = vst.msk [vmem:[%s358 + $0x68] sm:$0xff] %vm1060, %v2400
        %2417 = vst.msk [vmem:[%s358 + $0x70] sm:$0xff] %vm1060, %v2401
        %2418 = vst.msk [vmem:[%s358 + $0x78] sm:$0xff] %vm1060, %v2402
        %s2419 = sand.u32 %s202, 1
        %s2420 = scalar_lea.sflag [#allocation4], %s2419
        %s2421 = sand.u32 %s202, 1
        %s2422 = smul.addr %s2421, 128
        %s2423 = scalar_lea.vmem [#allocation3], %s2422
        // Predicated region
        $region45: #{tpu_custom_call.1} parent=43 // pred_check
          %p2424 = pneg %p212
        $region46: #{tpu_custom_call.1} parent=43 // pred_check_branch
          %2426 = sbr.rel (%p2424) target = $region48
        $region47: #{tpu_custom_call.1} parent=43 // pred_region
          %s2427 = smul.u32 8, %s26
          %s2429 = ssub.s32 2048, 2048
          %2430 = vsyncadd %s2420, %s2429
          %s2431 = smul.addr %s2427, 2
          %s2432 = smul.addr %s25, 32
          %s2433 = sadd.s32 %s2431, %s2432
          %s2434 = smul.addr %s2433, 128
          %s2435 = scalar_lea.hbm %s6, %s2434
          %s2436 = sshll.u32 %s2423, 4
          %s2437 = int_to_ptr.vmem [resolvable:$true] %s2436
          %2442 = dma.vmem_to_hbm [thread:$0]  %s2437, 2048, %s2435, %s2420, 128, 128, 8
        $region48: #{tpu_custom_call.1} parent=43 // pred_fallthru
          _
      $region44: #{tpu_custom_call.1} parent=5 // pred_fallthru
        _
      %p2443 = scmp.le.s32.totalorder 2, %s16
      // Predicated region
      $region49: #{tpu_custom_call.1} parent=5 // pred_check
        %p2444 = pneg %p2443
      $region50: #{tpu_custom_call.1} parent=5 // pred_check_branch
        %2446 = sbr.rel (%p2444) target = $region52
      $region51: #{tpu_custom_call.1} parent=5 // pred_region
        %s2447 = ssub.s32 %s16, 2
        // Predicated region
        $region53: #{tpu_custom_call.1} parent=51 // pred_check
          %p2448 = pneg %p218
        $region54: #{tpu_custom_call.1} parent=51 // pred_check_branch
          %2450 = sbr.rel (%p2448) target = $region56
        $region55: #{tpu_custom_call.1} parent=51 // pred_region
          %s2451 = sand.u32 %s203, 1
          %s2452 = scalar_lea.sflag [#allocation4], %s2451
          %s2453 = sand.u32 %s203, 1
          %s2454 = smul.addr %s2453, 128
          %s2455 = scalar_lea.vmem [#allocation3], %s2454
          %2456 = dma.done %s2452, 2048
        $region56: #{tpu_custom_call.1} parent=51 // pred_fallthru
          _
      $region52: #{tpu_custom_call.1} parent=5 // pred_fallthru
        _
    $region6: #{tpu_custom_call.1} parent=1 // loop_footer
      %s20 = sadd.s32 1, %s16
    $region7: #{tpu_custom_call.1} parent=1 // loop_footer_branch
      %15 = sbr.rel target = $region3
    $region8: #{tpu_custom_call.1} parent=1 // loop_exit
      _
    %2457 = vsyncpa [#allocation4], 1
    %s2458 = scalar_lea.sflag [#allocation4], 1
    %2459 = vsyncpa %s2458, 1

</llo_original>
